<compile_context>
chip_gen: v6e
topology: v6e:2x2x1
jax: 0.10.0
libtpu: 0.0.40
codegen_flags: <defaults>
</compile_context>

<pallas_src>
import functools

import numpy as np
import jax
import jax.numpy as jnp
from jax import lax
from jax.experimental import pallas as pl
from jax.experimental.pallas import tpu as pltpu

LANE = 128     # TPU lane width; hidden and output dims are zero-padded to this.
TILE_B = 256   # batch rows per grid step (256-512 amortizes per-step overhead, fits VMEM easily)


def _round_up(n, m):
    return ((n + m - 1) // m) * m


# --------------------------------------------------------------------------------------
# Kernel 1: gridded 3-layer MLP, one batch tile per grid step.  Emits f32 logits (B, 128).
# --------------------------------------------------------------------------------------
def mlp_logits_kernel(x_ref, w_ref, b_ref, o_ref):
    # x_ref: (TILE_B, D_pad) bf16 batch tile
    # w_ref: (D_pad + 2*LANE, LANE) bf16 slab = [W0 ; W1 ; W2] in (in, out) layout, zero-padded
    # b_ref: (3, LANE) f32 = [b0 ; b1 ; b2], zero-padded
    # o_ref: (TILE_B, LANE) f32 lane-dense logits; only [:, :10] is meaningful
    d = w_ref.shape[0] - 2 * LANE
    x = x_ref[...]

    h = jnp.dot(x, w_ref[0:d, :], preferred_element_type=jnp.float32) + b_ref[0:1, :]
    h = jnp.maximum(h, 0.0).astype(jnp.bfloat16)

    h = jnp.dot(h, w_ref[d:d + LANE, :], preferred_element_type=jnp.float32) + b_ref[1:2, :]
    h = jnp.maximum(h, 0.0).astype(jnp.bfloat16)

    h = jnp.dot(h, w_ref[d + LANE:d + 2 * LANE, :], preferred_element_type=jnp.float32) + b_ref[2:3, :]
    o_ref[...] = jnp.maximum(h, 0.0)


# --------------------------------------------------------------------------------------
# Kernel 2: two-pass log_softmax over dim 0 (batch), tiled over batch.
# grid = (2, num_tiles): phase 0 accumulates per-column running max / sum-exp in VMEM scratch
# (masking padded batch rows); phase 1 applies z - logsumexp.  The last write per output block
# (phase 1) wins.
# --------------------------------------------------------------------------------------
def log_softmax_axis0_kernel(z_ref, o_ref, m_sc, l_sc, *, n_valid, tile_b):
    phase = pl.program_id(0)
    t = pl.program_id(1)
    z = z_ref[...]  # (tile_b, LANE) f32

    @pl.when(phase == 0)
    def _():
        @pl.when(t == 0)
        def _():
            m_sc[...] = jnp.full(m_sc.shape, -jnp.inf, m_sc.dtype)
            l_sc[...] = jnp.zeros(l_sc.shape, l_sc.dtype)

        row = t * tile_b + lax.broadcasted_iota(jnp.int32, (tile_b, LANE), 0)
        valid = row < n_valid                                    # mask padded batch rows
        zm = jnp.where(valid, z, -jnp.inf)
        m_new = jnp.maximum(m_sc[...], jnp.max(zm, axis=0, keepdims=True))
        l_sc[...] = l_sc[...] * jnp.exp(m_sc[...] - m_new) + jnp.sum(
            jnp.where(valid, jnp.exp(z - m_new), 0.0), axis=0, keepdims=True)
        m_sc[...] = m_new
        o_ref[...] = z   # placeholder; this block is fully rewritten in phase 1

    @pl.when(phase == 1)
    def _():
        lse = m_sc[...] + jnp.log(l_sc[...])
        o_ref[...] = z - lse


# --------------------------------------------------------------------------------------
# Parameter init / packing
# --------------------------------------------------------------------------------------
def init_firstnet_params(key, image_size):
    """Deterministic init mimicking nn.Linear default (uniform +/- 1/sqrt(fan_in)).

    Returns unpadded f32 params: [(W (in,out), b (out,)), ...] for the 3 layers.
    """
    dims = [(image_size, 100), (100, 50), (50, 10)]
    params = []
    for fan_in, fan_out in dims:
        key, kw, kb = jax.random.split(key, 3)
        bound = 1.0 / np.sqrt(fan_in)
        # nn.Linear stores weight as (out, in); transpose to (in, out) for x @ W^T.
        w = jax.random.uniform(kw, (fan_out, fan_in), jnp.float32, -bound, bound)
        b = jax.random.uniform(kb, (fan_out,), jnp.float32, -bound, bound)
        params.append((w.T, b))
    return params


def pack_params(params):
    """Zero-pad hidden/output dims to LANE, pad D up to a multiple of LANE, pack the three
    weights into one bf16 slab and the three biases into one f32 slab."""
    (w0, b0), (w1, b1), (w2, b2) = params
    d = w0.shape[0]
    d_pad = max(LANE, _round_up(d, LANE))   # keeps all slab slice boundaries tile-aligned

    def padw(w, rows):
        return jnp.pad(w, ((0, rows - w.shape[0]), (0, LANE - w.shape[1])))

    def padb(b):
        return jnp.pad(b, ((0, LANE - b.shape[0]),))

    w_slab = jnp.concatenate(
        [padw(w0, d_pad), padw(w1, LANE), padw(w2, LANE)], axis=0
    ).astype(jnp.bfloat16)                                   # (d_pad + 2*LANE, LANE) bf16
    b_slab = jnp.stack([padb(b0), padb(b1), padb(b2)], axis=0).astype(jnp.float32)  # (3, LANE)
    return w_slab, b_slab


# --------------------------------------------------------------------------------------
# Forward
# --------------------------------------------------------------------------------------
@functools.partial(jax.jit, static_argnames="tile_b")
def firstnet_forward(x_nchw, w_slab, b_slab, tile_b=TILE_B):
    d_pad = w_slab.shape[0] - 2 * LANE
    b_real = x_nchw.shape[0]
    x = x_nchw.reshape(b_real, -1).astype(jnp.float32)       # == x.view(-1, image_size)
    d = x.shape[1]

    b_pad = _round_up(max(b_real, 1), tile_b)
    num_tiles = b_pad // tile_b
    x = jnp.pad(x, ((0, b_pad - b_real), (0, d_pad - d))).astype(jnp.bfloat16)

    # Weights/biases: constant index_map -> DMA'd once, VMEM-resident across batch tiles.
    w_spec = pl.BlockSpec((d_pad + 2 * LANE, LANE), lambda i: (0, 0))
    b_spec = pl.BlockSpec((3, LANE), lambda i: (0, 0))

    logits = pl.pallas_call(
        mlp_logits_kernel,
        out_shape=jax.ShapeDtypeStruct((b_pad, LANE), jnp.float32),
        grid=(num_tiles,),
        in_specs=[
            pl.BlockSpec((tile_b, d_pad), lambda i: (i, 0)),   # stream x per batch tile
            w_spec,
            b_spec,
        ],
        out_specs=pl.BlockSpec((tile_b, LANE), lambda i: (i, 0)),
        compiler_params=pltpu.CompilerParams(
            dimension_semantics=("parallel",),                 # megacore sharding on v7x
            vmem_limit_bytes=32 * 1024 * 1024,                 # safe on v5e/v6e/v7x (64 MiB)
        ),
        cost_estimate=pl.CostEstimate(
            flops=2 * b_pad * (d_pad * LANE + LANE * LANE + LANE * LANE),
            transcendentals=0,
            bytes_accessed=2 * x.size + 2 * w_slab.size + 4 * b_slab.size + 4 * b_pad * LANE,
        ),
    )(x, w_slab, b_slab)

    ls_kernel = functools.partial(log_softmax_axis0_kernel, n_valid=b_real, tile_b=tile_b)
    out = pl.pallas_call(
        ls_kernel,
        out_shape=jax.ShapeDtypeStruct((b_pad, LANE), jnp.float32),
        grid=(2, num_tiles),
        in_specs=[pl.BlockSpec((tile_b, LANE), lambda p, t: (t, 0))],
        out_specs=pl.BlockSpec((tile_b, LANE), lambda p, t: (t, 0)),
        scratch_shapes=[pltpu.VMEM((1, LANE), jnp.float32),    # running column max
                        pltpu.VMEM((1, LANE), jnp.float32)],   # running column sum-exp
        compiler_params=pltpu.CompilerParams(
            dimension_semantics=("arbitrary", "arbitrary"),
            vmem_limit_bytes=32 * 1024 * 1024,
        ),
        cost_estimate=pl.CostEstimate(
            flops=6 * b_pad * LANE,
            transcendentals=b_pad * LANE + num_tiles * LANE,
            bytes_accessed=4 * 4 * b_pad * LANE,
        ),
    )(logits)

    # Drop padded batch rows and the zero-padded lanes; only the first 10 columns are real.
    return out[:b_real, :10]


def firstnet_reference(x_nchw, params):
    b = x_nchw.shape[0]
    x = x_nchw.reshape(b, -1).astype(jnp.float32)
    (w0, b0), (w1, b1), (w2, b2) = params
    h = jnp.maximum(x @ w0 + b0, 0.0)
    h = jnp.maximum(h @ w1 + b1, 0.0)
    h = jnp.maximum(h @ w2 + b2, 0.0)
    return jax.nn.log_softmax(h, axis=0)


if __name__ == "__main__":
    key = jax.random.PRNGKey(0)
    k_x, k_p = jax.random.split(key)

    # MNIST-like NCHW input, image_size = 256.  B=512 -> two 256-row batch tiles: large enough
    # to amortize launch/DMA overhead and exercise the gridded pipeline + tiled axis-0
    # log-softmax, still tiny in absolute memory (~0.5 MiB of input).
    B, C, H, W = 512, 1, 16, 16
    image_size = C * H * W  # 256

    x = jax.random.normal(k_x, (B, C, H, W), jnp.float32)
    params = init_firstnet_params(k_p, image_size)
    w_slab, b_slab = pack_params(params)

    y = jax.block_until_ready(firstnet_forward(x, w_slab, b_slab))
    y_ref = jax.block_until_ready(firstnet_reference(x, params))

    assert y.shape == (B, 10)
    # bf16 operands (f32 accumulation) vs. f32 reference: loosened tolerance per review.
    assert np.allclose(np.asarray(y), np.asarray(y_ref), atol=2e-2, rtol=2e-2), float(
        np.max(np.abs(np.asarray(y) - np.asarray(y_ref))))

    print("KERNEL_OK")
</pallas_src>

<mosaic_0001>
module attributes {stable_mosaic.version = 11 : i64} {
  func.func @log_softmax_axis0_kernel(%arg0: i32, %arg1: i32, %arg2: memref<256x128xf32, #tpu.memory_space<vmem>>, %arg3: memref<256x128xf32, #tpu.memory_space<vmem>>, %arg4: memref<1x128xf32, #tpu.memory_space<vmem>>, %arg5: memref<1x128xf32, #tpu.memory_space<vmem>>) attributes {dimension_semantics = [#tpu.dimension_semantics<arbitrary>, #tpu.dimension_semantics<arbitrary>], iteration_bounds = array<i64: 2, 2>, scalar_prefetch = 0 : i64, scratch_operands = 2 : i64, tpu.core_type = #tpu.core_type<tc>, window_params = [{transform_indices = @transform_0, window_bounds = array<i64: 256, 128>}, {transform_indices = @transform_1, window_bounds = array<i64: 256, 128>}]} {
    %c0 = arith.constant 0 : index
    %c0_0 = arith.constant 0 : index
    %0 = vector.load %arg2[%c0, %c0_0] : memref<256x128xf32, #tpu.memory_space<vmem>>, vector<256x128xf32>
    %c0_i32 = arith.constant 0 : i32
    %1 = arith.cmpi eq, %arg0, %c0_i32 : i32
    %2 = arith.extui %1 : i1 to i32
    %c0_i32_1 = arith.constant 0 : i32
    %3 = arith.cmpi ne, %2, %c0_i32_1 : i32
    scf.if %3 {
      %c0_i32_3 = arith.constant 0 : i32
      %7 = arith.cmpi eq, %arg1, %c0_i32_3 : i32
      %8 = arith.extui %7 : i1 to i32
      %c0_i32_4 = arith.constant 0 : i32
      %9 = arith.cmpi ne, %8, %c0_i32_4 : i32
      scf.if %9 {
        %cst_20 = arith.constant 0xFF800000 : f32
        %38 = vector.broadcast %cst_20 : f32 to vector<1x128xf32>
        %c0_21 = arith.constant 0 : index
        %c0_22 = arith.constant 0 : index
        %39 = vector.load %arg4[%c0_21, %c0_22] : memref<1x128xf32, #tpu.memory_space<vmem>>, vector<1x128xf32>
        tpu.vector_store %arg4[%c0_21, %c0_22], %38 {strides = array<i32>} : memref<1x128xf32, #tpu.memory_space<vmem>>, vector<1x128xf32>,
        %cst_23 = arith.constant 0.000000e+00 : f32
        %40 = vector.broadcast %cst_23 : f32 to vector<1x128xf32>
        %c0_24 = arith.constant 0 : index
        %c0_25 = arith.constant 0 : index
        %41 = vector.load %arg5[%c0_24, %c0_25] : memref<1x128xf32, #tpu.memory_space<vmem>>, vector<1x128xf32>
        tpu.vector_store %arg5[%c0_24, %c0_25], %40 {strides = array<i32>} : memref<1x128xf32, #tpu.memory_space<vmem>>, vector<1x128xf32>,
      } else {
      }
      %c256_i32 = arith.constant 256 : i32
      %10 = arith.muli %arg1, %c256_i32 : i32
      %11 = tpu.iota {dimensions = array<i32: 0>} : vector<256x128xi32>
      %12 = vector.broadcast %10 : i32 to vector<256x128xi32>
      %13 = arith.addi %12, %11 : vector<256x128xi32>
      %c512_i32 = arith.constant 512 : i32
      %14 = vector.broadcast %c512_i32 : i32 to vector<256x128xi32>
      %15 = arith.cmpi slt, %13, %14 : vector<256x128xi32>
      %cst = arith.constant 0xFF800000 : f32
      %16 = vector.broadcast %cst : f32 to vector<256x128xf32>
      %17 = arith.select %15, %0, %16 : vector<256x128xi1>, vector<256x128xf32>
      %c0_5 = arith.constant 0 : index
      %c0_6 = arith.constant 0 : index
      %18 = vector.load %arg4[%c0_5, %c0_6] : memref<1x128xf32, #tpu.memory_space<vmem>>, vector<1x128xf32>
      %cst_7 = arith.constant dense<0xFF800000> : vector<128xf32>
      %19 = vector.multi_reduction <maximumf>, %17, %cst_7 [0] : vector<256x128xf32> to vector<128xf32>
      %20 = vector.shape_cast %19 : vector<128xf32> to vector<1x128xf32>
      %21 = arith.maximumf %18, %20 : vector<1x128xf32>
      %c0_8 = arith.constant 0 : index
      %c0_9 = arith.constant 0 : index
      %22 = vector.load %arg5[%c0_8, %c0_9] : memref<1x128xf32, #tpu.memory_space<vmem>>, vector<1x128xf32>
      %c0_10 = arith.constant 0 : index
      %c0_11 = arith.constant 0 : index
      %23 = vector.load %arg4[%c0_10, %c0_11] : memref<1x128xf32, #tpu.memory_space<vmem>>, vector<1x128xf32>
      %24 = arith.subf %23, %21 : vector<1x128xf32>
      %25 = math.exp %24 : vector<1x128xf32>
      %26 = arith.mulf %22, %25 : vector<1x128xf32>
      %27 = vector.broadcast %21 : vector<1x128xf32> to vector<256x128xf32>
      %28 = arith.subf %0, %27 : vector<256x128xf32>
      %29 = math.exp %28 : vector<256x128xf32>
      %cst_12 = arith.constant 0.000000e+00 : f32
      %30 = vector.broadcast %cst_12 : f32 to vector<256x128xf32>
      %31 = arith.select %15, %29, %30 : vector<256x128xi1>, vector<256x128xf32>
      %cst_13 = arith.constant dense<0.000000e+00> : vector<128xf32>
      %32 = vector.multi_reduction <add>, %31, %cst_13 [0] : vector<256x128xf32> to vector<128xf32>
      %33 = vector.shape_cast %32 : vector<128xf32> to vector<1x128xf32>
      %34 = arith.addf %26, %33 : vector<1x128xf32>
      %c0_14 = arith.constant 0 : index
      %c0_15 = arith.constant 0 : index
      %35 = vector.load %arg5[%c0_14, %c0_15] : memref<1x128xf32, #tpu.memory_space<vmem>>, vector<1x128xf32>
      tpu.vector_store %arg5[%c0_14, %c0_15], %34 {strides = array<i32>} : memref<1x128xf32, #tpu.memory_space<vmem>>, vector<1x128xf32>,
      %c0_16 = arith.constant 0 : index
      %c0_17 = arith.constant 0 : index
      %36 = vector.load %arg4[%c0_16, %c0_17] : memref<1x128xf32, #tpu.memory_space<vmem>>, vector<1x128xf32>
      tpu.vector_store %arg4[%c0_16, %c0_17], %21 {strides = array<i32>} : memref<1x128xf32, #tpu.memory_space<vmem>>, vector<1x128xf32>,
      %c0_18 = arith.constant 0 : index
      %c0_19 = arith.constant 0 : index
      %37 = vector.load %arg3[%c0_18, %c0_19] : memref<256x128xf32, #tpu.memory_space<vmem>>, vector<256x128xf32>
      tpu.vector_store %arg3[%c0_18, %c0_19], %0 {strides = array<i32>} : memref<256x128xf32, #tpu.memory_space<vmem>>, vector<256x128xf32>,
    } else {
    }
    %c1_i32 = arith.constant 1 : i32
    %4 = arith.cmpi eq, %arg0, %c1_i32 : i32
    %5 = arith.extui %4 : i1 to i32
    %c0_i32_2 = arith.constant 0 : i32
    %6 = arith.cmpi ne, %5, %c0_i32_2 : i32
    scf.if %6 {
      %c0_3 = arith.constant 0 : index
      %c0_4 = arith.constant 0 : index
      %7 = vector.load %arg4[%c0_3, %c0_4] : memref<1x128xf32, #tpu.memory_space<vmem>>, vector<1x128xf32>
      %c0_5 = arith.constant 0 : index
      %c0_6 = arith.constant 0 : index
      %8 = vector.load %arg5[%c0_5, %c0_6] : memref<1x128xf32, #tpu.memory_space<vmem>>, vector<1x128xf32>
      %9 = math.log %8 : vector<1x128xf32>
      %10 = arith.addf %7, %9 : vector<1x128xf32>
      %11 = vector.broadcast %10 : vector<1x128xf32> to vector<256x128xf32>
      %12 = arith.subf %0, %11 : vector<256x128xf32>
      %c0_7 = arith.constant 0 : index
      %c0_8 = arith.constant 0 : index
      %13 = vector.load %arg3[%c0_7, %c0_8] : memref<256x128xf32, #tpu.memory_space<vmem>>, vector<256x128xf32>
      tpu.vector_store %arg3[%c0_7, %c0_8], %12 {strides = array<i32>} : memref<256x128xf32, #tpu.memory_space<vmem>>, vector<256x128xf32>,
    } else {
    }
    return
  }
  func.func @transform_0(%arg0: i32, %arg1: i32) -> (i32, i32) {
    %c0_i32 = arith.constant 0 : i32
    %c0_i32_0 = arith.constant 0 : i32
    return %arg1, %c0_i32 : i32, i32
  }
  func.func @transform_1(%arg0: i32, %arg1: i32) -> (i32, i32) {
    %c0_i32 = arith.constant 0 : i32
    %c0_i32_0 = arith.constant 0 : i32
    return %arg1, %c0_i32 : i32, i32
  }
}

module attributes {stable_mosaic.version = 11 : i64} {
  func.func @mlp_logits_kernel(%arg0: i32, %arg1: memref<256x256xbf16, #tpu.memory_space<vmem>>, %arg2: memref<512x128xbf16, #tpu.memory_space<vmem>>, %arg3: memref<3x128xf32, #tpu.memory_space<vmem>>, %arg4: memref<256x128xf32, #tpu.memory_space<vmem>>) attributes {dimension_semantics = [#tpu.dimension_semantics<parallel>], iteration_bounds = array<i64: 2>, scalar_prefetch = 0 : i64, scratch_operands = 0 : i64, tpu.core_type = #tpu.core_type<tc>, window_params = [{transform_indices = @transform_0, window_bounds = array<i64: 256, 256>}, {pipeline_mode = #tpu.pipeline_mode<synchronous>, transform_indices = @transform_1, window_bounds = array<i64: 512, 128>}, {pipeline_mode = #tpu.pipeline_mode<synchronous>, transform_indices = @transform_2, window_bounds = array<i64: 3, 128>}, {transform_indices = @transform_3, window_bounds = array<i64: 256, 128>}]} {
    %c0 = arith.constant 0 : index
    %c0_0 = arith.constant 0 : index
    %0 = vector.load %arg1[%c0, %c0_0] : memref<256x256xbf16, #tpu.memory_space<vmem>>, vector<256x256xbf16>
    %c0_1 = arith.constant 0 : index
    %c0_2 = arith.constant 0 : index
    %1 = vector.load %arg2[%c0_1, %c0_2] : memref<512x128xbf16, #tpu.memory_space<vmem>>, vector<256x128xbf16>
    %cst = arith.constant dense<0.000000e+00> : vector<256x128xf32>
    %2 = tpu.matmul %0, %1, %cst {dimension_numbers = #tpu.dot_dimension_numbers<[1], [0], [0], [1], [0, 0, 1, 1], [], []>} : vector<256x256xbf16>, vector<256x128xbf16>, vector<256x128xf32> -> vector<256x128xf32>
    %c0_3 = arith.constant 0 : index
    %c0_4 = arith.constant 0 : index
    %3 = vector.load %arg3[%c0_3, %c0_4] : memref<3x128xf32, #tpu.memory_space<vmem>>, vector<1x128xf32>
    %4 = vector.broadcast %3 : vector<1x128xf32> to vector<256x128xf32>
    %5 = arith.addf %2, %4 : vector<256x128xf32>
    %cst_5 = arith.constant 0.000000e+00 : f32
    %6 = vector.broadcast %cst_5 : f32 to vector<256x128xf32>
    %7 = arith.maximumf %5, %6 : vector<256x128xf32>
    %8 = arith.truncf %7 : vector<256x128xf32> to vector<256x128xbf16>
    %c256 = arith.constant 256 : index
    %c0_6 = arith.constant 0 : index
    %9 = vector.load %arg2[%c256, %c0_6] : memref<512x128xbf16, #tpu.memory_space<vmem>>, vector<128x128xbf16>
    %cst_7 = arith.constant dense<0.000000e+00> : vector<256x128xf32>
    %10 = tpu.matmul %8, %9, %cst_7 {dimension_numbers = #tpu.dot_dimension_numbers<[1], [0], [0], [1], [0, 0, 1, 1], [], []>} : vector<256x128xbf16>, vector<128x128xbf16>, vector<256x128xf32> -> vector<256x128xf32>
    %c1 = arith.constant 1 : index
    %c0_8 = arith.constant 0 : index
    %11 = vector.load %arg3[%c1, %c0_8] : memref<3x128xf32, #tpu.memory_space<vmem>>, vector<1x128xf32>
    %12 = vector.broadcast %11 : vector<1x128xf32> to vector<256x128xf32>
    %13 = arith.addf %10, %12 : vector<256x128xf32>
    %cst_9 = arith.constant 0.000000e+00 : f32
    %14 = vector.broadcast %cst_9 : f32 to vector<256x128xf32>
    %15 = arith.maximumf %13, %14 : vector<256x128xf32>
    %16 = arith.truncf %15 : vector<256x128xf32> to vector<256x128xbf16>
    %c384 = arith.constant 384 : index
    %c0_10 = arith.constant 0 : index
    %17 = vector.load %arg2[%c384, %c0_10] : memref<512x128xbf16, #tpu.memory_space<vmem>>, vector<128x128xbf16>
    %cst_11 = arith.constant dense<0.000000e+00> : vector<256x128xf32>
    %18 = tpu.matmul %16, %17, %cst_11 {dimension_numbers = #tpu.dot_dimension_numbers<[1], [0], [0], [1], [0, 0, 1, 1], [], []>} : vector<256x128xbf16>, vector<128x128xbf16>, vector<256x128xf32> -> vector<256x128xf32>
    %c2 = arith.constant 2 : index
    %c0_12 = arith.constant 0 : index
    %19 = vector.load %arg3[%c2, %c0_12] : memref<3x128xf32, #tpu.memory_space<vmem>>, vector<1x128xf32>
    %20 = vector.broadcast %19 : vector<1x128xf32> to vector<256x128xf32>
    %21 = arith.addf %18, %20 : vector<256x128xf32>
    %cst_13 = arith.constant 0.000000e+00 : f32
    %22 = vector.broadcast %cst_13 : f32 to vector<256x128xf32>
    %23 = arith.maximumf %21, %22 : vector<256x128xf32>
    %c0_14 = arith.constant 0 : index
    %c0_15 = arith.constant 0 : index
    %24 = vector.load %arg4[%c0_14, %c0_15] : memref<256x128xf32, #tpu.memory_space<vmem>>, vector<256x128xf32>
    tpu.vector_store %arg4[%c0_14, %c0_15], %23 {strides = array<i32>} : memref<256x128xf32, #tpu.memory_space<vmem>>, vector<256x128xf32>,
    return
  }
  func.func @transform_0(%arg0: i32) -> (i32, i32) {
    %c0_i32 = arith.constant 0 : i32
    %c0_i32_0 = arith.constant 0 : i32
    return %arg0, %c0_i32 : i32, i32
  }
  func.func @transform_1(%arg0: i32) -> (i32, i32) {
    %c0_i32 = arith.constant 0 : i32
    %c0_i32_0 = arith.constant 0 : i32
    %c0_i32_1 = arith.constant 0 : i32
    return %c0_i32, %c0_i32_0 : i32, i32
  }
  func.func @transform_2(%arg0: i32) -> (i32, i32) {
    %c0_i32 = arith.constant 0 : i32
    %c0_i32_0 = arith.constant 0 : i32
    %c0_i32_1 = arith.constant 0 : i32
    return %c0_i32, %c0_i32_0 : i32, i32
  }
  func.func @transform_3(%arg0: i32) -> (i32, i32) {
    %c0_i32 = arith.constant 0 : i32
    %c0_i32_0 = arith.constant 0 : i32
    return %arg0, %c0_i32 : i32, i32
  }
}

</mosaic_0001>

<llo_original>
// kernel: firstnet_forward.3
$region0: #{firstnet_forward.3}
  #allocation0 [shape = 'u32[]', space=smem, size = 0x4, offset = 0x4, fixed_abs, tag = 'smem constant byte address 0x4 - core index']
  #allocation1 [shape = 'u32[144,128]{1,0:T(1,128)}', space=vmem, size = 0x12000, scoped, tag = 'internal scratch']
  #allocation2 [shape = 'f32[1,128]{1,0:T(1,128)}', space=vmem, size = 0x200, scoped, tag = 'scratch operand']
  #allocation3 [shape = 'f32[1,128]{1,0:T(1,128)}', space=vmem, size = 0x200, scoped, tag = 'scratch operand']
  %s0 = inlined_call_operand.vmem [shape: f32[512,128], index: 0, kind: input, shape index: {}]
  %s1 = inlined_call_operand.vmem [shape: f32[512,128], index: 1, kind: output, shape index: {}]
  %s2 = sld [smem:[#allocation0]]
  $region49: #{firstnet_forward.3} parent=0
    _
  %s4 = ssub.s32 1, %s2
  %s5 = scalar_select 0, %s4, %s2
  loop: start=0, step=1, limit=6
  $region2: #{firstnet_forward.3} parent=0 // loop_pre_header
    _
  $region3: #{firstnet_forward.3} parent=0 // loop_header
    %s7 = sphi 0, %s11
    %p8 = scmp.ge.s32.totalorder %s7, 6
    %s14 = sphi 0, %s26
    %s15 = sphi 0, %s22
    %s16 = sphi 0, %s14
    %s17 = sphi 0, %s15
    %s18 = sphi 0, %s16
    %s19 = sphi 0, %s17
    %s29 = sphi 0, %s31
    %s32 = sphi 0, %s29
    %s33 = sphi 0, %s32
    %s49 = sphi 0, %s33
    %s55 = sphi 0, %s57
    %s58 = sphi 0, %s55
    %s59 = sphi 0, %s58
    %s75 = sphi 0, %s59
  $region4: #{firstnet_forward.3} parent=0 // loop_header_branch
    %10 = sbr.rel (%p8) target = $region8
  $region5: #{firstnet_forward.3} parent=0 // loop_body
    %s12 = ssub.s32 %s7, 1
    %s13 = ssub.s32 %s7, 2
    %s20 = sadd.s32 1, %s15
    %p21 = scmp.ge.s32.totalorder %s20, 2
    %s22 = scalar_select %p21, 0, %s20
    %s23 = sadd.s32 1, %s14
    %s24 = scalar_select %p21, %s23, %s14
    %p25 = scmp.ge.s32.totalorder %s24, 2
    %s26 = scalar_select %p25, 0, %s24
    %s27 = ssub.s32 %s15, %s22
    %p28 = scmp.eq.s32.totalorder %s27, 0
    %s30 = sadd.s32 %s29, 1
    %s31 = scalar_select %p28, %s29, %s30
    %p34 = pneg %p28
    %p35 = scmp.eq.s32.totalorder %s7, 3
    %p36 = por %p34, %p35
    %p37 = scmp.ne.s32.totalorder %s29, %s32
    %p38 = scmp.eq.s32.totalorder %s7, 0
    %p39 = por %p37, %p38
    %p40 = scmp.ne.s32.totalorder %s29, %s32
    %p41 = scmp.eq.s32.totalorder %s12, 3
    %p42 = por %p40, %p41
    %p43 = scmp.ne.s32.totalorder %s32, %s33
    %p44 = scmp.eq.s32.totalorder %s12, 0
    %p45 = por %p43, %p44
    %p46 = scmp.ne.s32.totalorder %s32, %s33
    %p47 = scmp.eq.s32.totalorder %s13, 3
    %p48 = por %p46, %p47
    %p50 = scmp.ne.s32.totalorder %s33, %s49
    %p51 = scmp.eq.s32.totalorder %s13, 0
    %p52 = por %p50, %p51
    %s53 = ssub.s32 %s15, %s22
    %p54 = scmp.eq.s32.totalorder %s53, 0
    %s56 = sadd.s32 %s55, 1
    %s57 = scalar_select %p54, %s55, %s56
    %p60 = pneg %p54
    %p61 = scmp.eq.s32.totalorder %s7, 3
    %p62 = por %p60, %p61
    %p63 = scmp.ne.s32.totalorder %s55, %s58
    %p64 = scmp.eq.s32.totalorder %s7, 0
    %p65 = por %p63, %p64
    %p66 = scmp.ne.s32.totalorder %s55, %s58
    %p67 = scmp.eq.s32.totalorder %s12, 3
    %p68 = por %p66, %p67
    %p69 = scmp.ne.s32.totalorder %s58, %s59
    %p70 = scmp.eq.s32.totalorder %s12, 0
    %p71 = por %p69, %p70
    %p72 = scmp.ne.s32.totalorder %s58, %s59
    %p73 = scmp.eq.s32.totalorder %s13, 3
    %p74 = por %p72, %p73
    %p76 = scmp.ne.s32.totalorder %s59, %s75
    %p77 = scmp.eq.s32.totalorder %s13, 0
    %p78 = por %p76, %p77
    %p79 = scmp.le.s32.totalorder 1, %s7
    %p80 = scmp.lt.s32.totalorder %s7, 5
    %p81 = pnand %p79, %p80
    %p82 = pneg %p81
    // Predicated region
    $region9: #{firstnet_forward.3} parent=5 // pred_check
      _
    $region10: #{firstnet_forward.3} parent=5 // pred_check_branch
      %84 = sbr.rel (%p81) target = $region12
    $region11: #{firstnet_forward.3} parent=5 // pred_region
      %s85 = ssub.s32 %s7, 1
    $region12: #{firstnet_forward.3} parent=5 // pred_fallthru
      _
    %p86 = scmp.lt.s32.totalorder %s7, 4
    // Predicated region
    $region13: #{firstnet_forward.3} parent=5 // pred_check
      %p87 = pneg %p86
    $region14: #{firstnet_forward.3} parent=5 // pred_check_branch
      %89 = sbr.rel (%p87) target = $region16
    $region15: #{firstnet_forward.3} parent=5 // pred_region
      // Predicated region
      $region17: #{firstnet_forward.3} parent=15 // pred_check
        %p90 = pneg %p39
      $region18: #{firstnet_forward.3} parent=15 // pred_check_branch
        %92 = sbr.rel (%p90) target = $region20
      $region19: #{firstnet_forward.3} parent=15 // pred_region
        %s93 = smul.u32 32, %s15
        %p94 = scmp.lt.s32.totalorder %s93, 63
        %s95 = scalar_select %p94, %s93, 63
        %s96 = smul.addr %s95, 8
        %s97 = scalar_lea.vmem %s0, %s96
        %s98 = smul.u32 32, %s15
      $region20: #{firstnet_forward.3} parent=15 // pred_fallthru
        _
    $region16: #{firstnet_forward.3} parent=5 // pred_fallthru
      _
    %p99 = scmp.le.s32.totalorder 1, %s7
    %p100 = scmp.lt.s32.totalorder %s7, 5
    %p101 = pnand %p99, %p100
    %p102 = pneg %p101
    // Predicated region
    $region21: #{firstnet_forward.3} parent=5 // pred_check
      _
    $region22: #{firstnet_forward.3} parent=5 // pred_check_branch
      %104 = sbr.rel (%p101) target = $region24
    $region23: #{firstnet_forward.3} parent=5 // pred_region
      %s105 = ssub.s32 %s7, 1
      %s106 = smul.u32 32, %s17
      %p107 = scmp.lt.s32.totalorder %s106, 63
      %s108 = scalar_select %p107, %s106, 63
      %s109 = smul.addr %s108, 8
      %s110 = scalar_lea.vmem %s0, %s109
      %p111 = pneg %p45
      %p112 = pneg %p42
      %p113 = pneg %p71
      %p114 = pneg %p68
      %s115 = smul.u32 32, %s17
      %p116 = scmp.lt.s32.totalorder %s115, 63
      %s117 = scalar_select %p116, %s115, 63
      %s118 = smul.addr %s117, 8
      %s119 = scalar_lea.vmem %s1, %s118
      %s120 = smul.u32 32, %s17
      %p121 = scmp.lt.s32.totalorder %s120, 63
      %s122 = scalar_select %p121, %s120, 63
      %s123 = smul.addr %s122, 8
      %s124 = scalar_lea.vmem %s0, %s123
      %s125 = smul.u32 32, %s17
      %s126 = smul.u32 32, %s17
      %p127 = scmp.lt.s32.totalorder %s126, 63
      %s128 = scalar_select %p127, %s126, 63
      %s129 = smul.addr %s128, 8
      %s130 = scalar_lea.vmem %s1, %s129
      %s131 = smul.u32 32, %s17
      %v132 = vld [vmem:[%s124] sm:$0xff]
      %v133 = vld [vmem:[%s124 + $0x8] sm:$0xff]
      %v134 = vld [vmem:[%s124 + $0x10] sm:$0xff]
      %v135 = vld [vmem:[%s124 + $0x18] sm:$0xff]
      %v136 = vld [vmem:[%s124 + $0x20] sm:$0xff]
      %v137 = vld [vmem:[%s124 + $0x28] sm:$0xff]
      %v138 = vld [vmem:[%s124 + $0x30] sm:$0xff]
      %v139 = vld [vmem:[%s124 + $0x38] sm:$0xff]
      %v140 = vld [vmem:[%s124 + $0x40] sm:$0xff]
      %v141 = vld [vmem:[%s124 + $0x48] sm:$0xff]
      %v142 = vld [vmem:[%s124 + $0x50] sm:$0xff]
      %v143 = vld [vmem:[%s124 + $0x58] sm:$0xff]
      %v144 = vld [vmem:[%s124 + $0x60] sm:$0xff]
      %v145 = vld [vmem:[%s124 + $0x68] sm:$0xff]
      %v146 = vld [vmem:[%s124 + $0x70] sm:$0xff]
      %v147 = vld [vmem:[%s124 + $0x78] sm:$0xff]
      %v148 = vld [vmem:[%s124 + $0x80] sm:$0xff]
      %v149 = vld [vmem:[%s124 + $0x88] sm:$0xff]
      %v150 = vld [vmem:[%s124 + $0x90] sm:$0xff]
      %v151 = vld [vmem:[%s124 + $0x98] sm:$0xff]
      %v152 = vld [vmem:[%s124 + $0xa0] sm:$0xff]
      %v153 = vld [vmem:[%s124 + $0xa8] sm:$0xff]
      %v154 = vld [vmem:[%s124 + $0xb0] sm:$0xff]
      %v155 = vld [vmem:[%s124 + $0xb8] sm:$0xff]
      %v156 = vld [vmem:[%s124 + $0xc0] sm:$0xff]
      %v157 = vld [vmem:[%s124 + $0xc8] sm:$0xff]
      %v158 = vld [vmem:[%s124 + $0xd0] sm:$0xff]
      %v159 = vld [vmem:[%s124 + $0xd8] sm:$0xff]
      %v160 = vld [vmem:[%s124 + $0xe0] sm:$0xff]
      %v161 = vld [vmem:[%s124 + $0xe8] sm:$0xff]
      %v162 = vld [vmem:[%s124 + $0xf0] sm:$0xff]
      %v163 = vld [vmem:[%s124 + $0xf8] sm:$0xff]
      %p164 = scmp.eq.s32.totalorder %s16, 0
      // Predicated region
      $region25: #{firstnet_forward.3} parent=23 // pred_check
        %p165 = pneg %p164
      $region26: #{firstnet_forward.3} parent=23 // pred_check_branch
        %167 = sbr.rel (%p165) target = $region28
      $region27: #{firstnet_forward.3} parent=23 // pred_region
        %p168 = scmp.eq.s32.totalorder %s17, 0
        // Predicated region
        $region29: #{firstnet_forward.3} parent=27 // pred_check
          %p169 = pneg %p168
        $region30: #{firstnet_forward.3} parent=27 // pred_check_branch
          %171 = sbr.rel (%p169) target = $region32
        $region31: #{firstnet_forward.3} parent=27 // pred_region
          %172 = vst [vmem:[#allocation2] sm:$0x1] -inf
          %173 = vst [vmem:[#allocation3] sm:$0x1] 0.0
        $region32: #{firstnet_forward.3} parent=27 // pred_fallthru
          _
        %s174 = smul.u32 %s17, 256
        %v175 = vlaneseq
        %v176 = vshrl.u32 %v175, 7
        %v177 = vadd.s32 %v176, 8
        %v178 = vadd.s32 %v176, 16
        %v179 = vadd.s32 %v176, 24
        %v180 = vadd.s32 %v176, 32
        %v181 = vadd.s32 %v176, 40
        %v182 = vadd.s32 %v176, 48
        %v183 = vadd.s32 %v176, 56
        %v184 = vadd.s32 %v176, 64
        %v185 = vadd.s32 %v176, 72
        %v186 = vadd.s32 %v176, 80
        %v187 = vadd.s32 %v176, 88
        %v188 = vadd.s32 %v176, 96
        %v189 = vadd.s32 %v176, 104
        %v190 = vadd.s32 %v176, 112
        %v191 = vadd.s32 %v176, 120
        %v192 = vadd.s32 %v176, 128
        %v193 = vadd.s32 %v176, 136
        %v194 = vadd.s32 %v176, 144
        %v195 = vadd.s32 %v176, 152
        %v196 = vadd.s32 %v176, 160
        %v197 = vadd.s32 %v176, 168
        %v198 = vadd.s32 %v176, 176
        %v199 = vadd.s32 %v176, 184
        %v200 = vadd.s32 %v176, 192
        %v201 = vadd.s32 %v176, 200
        %v202 = vadd.s32 %v176, 208
        %v203 = vadd.s32 %v176, 216
        %v204 = vadd.s32 %v176, 224
        %v205 = vadd.s32 %v176, 232
        %v206 = vadd.s32 %v176, 240
        %v207 = vadd.s32 %v176, 248
        %v208 = vstv %s174
        %v209 = vadd.s32 %v208, %v176
        %v210 = vadd.s32 %v208, %v177
        %v211 = vadd.s32 %v208, %v178
        %v212 = vadd.s32 %v208, %v179
        %v213 = vadd.s32 %v208, %v180
        %v214 = vadd.s32 %v208, %v181
        %v215 = vadd.s32 %v208, %v182
        %v216 = vadd.s32 %v208, %v183
        %v217 = vadd.s32 %v208, %v184
        %v218 = vadd.s32 %v208, %v185
        %v219 = vadd.s32 %v208, %v186
        %v220 = vadd.s32 %v208, %v187
        %v221 = vadd.s32 %v208, %v188
        %v222 = vadd.s32 %v208, %v189
        %v223 = vadd.s32 %v208, %v190
        %v224 = vadd.s32 %v208, %v191
        %v225 = vadd.s32 %v208, %v192
        %v226 = vadd.s32 %v208, %v193
        %v227 = vadd.s32 %v208, %v194
        %v228 = vadd.s32 %v208, %v195
        %v229 = vadd.s32 %v208, %v196
        %v230 = vadd.s32 %v208, %v197
        %v231 = vadd.s32 %v208, %v198
        %v232 = vadd.s32 %v208, %v199
        %v233 = vadd.s32 %v208, %v200
        %v234 = vadd.s32 %v208, %v201
        %v235 = vadd.s32 %v208, %v202
        %v236 = vadd.s32 %v208, %v203
        %v237 = vadd.s32 %v208, %v204
        %v238 = vadd.s32 %v208, %v205
        %v239 = vadd.s32 %v208, %v206
        %v240 = vadd.s32 %v208, %v207
        %vm241 = vcmp.lt.s32.totalorder %v209, 512
        %vm242 = vcmp.lt.s32.totalorder %v210, 512
        %vm243 = vcmp.lt.s32.totalorder %v211, 512
        %vm244 = vcmp.lt.s32.totalorder %v212, 512
        %vm245 = vcmp.lt.s32.totalorder %v213, 512
        %vm246 = vcmp.lt.s32.totalorder %v214, 512
        %vm247 = vcmp.lt.s32.totalorder %v215, 512
        %vm248 = vcmp.lt.s32.totalorder %v216, 512
        %vm249 = vcmp.lt.s32.totalorder %v217, 512
        %vm250 = vcmp.lt.s32.totalorder %v218, 512
        %vm251 = vcmp.lt.s32.totalorder %v219, 512
        %vm252 = vcmp.lt.s32.totalorder %v220, 512
        %vm253 = vcmp.lt.s32.totalorder %v221, 512
        %vm254 = vcmp.lt.s32.totalorder %v222, 512
        %vm255 = vcmp.lt.s32.totalorder %v223, 512
        %vm256 = vcmp.lt.s32.totalorder %v224, 512
        %vm257 = vcmp.lt.s32.totalorder %v225, 512
        %vm258 = vcmp.lt.s32.totalorder %v226, 512
        %vm259 = vcmp.lt.s32.totalorder %v227, 512
        %vm260 = vcmp.lt.s32.totalorder %v228, 512
        %vm261 = vcmp.lt.s32.totalorder %v229, 512
        %vm262 = vcmp.lt.s32.totalorder %v230, 512
        %vm263 = vcmp.lt.s32.totalorder %v231, 512
        %vm264 = vcmp.lt.s32.totalorder %v232, 512
        %vm265 = vcmp.lt.s32.totalorder %v233, 512
        %vm266 = vcmp.lt.s32.totalorder %v234, 512
        %vm267 = vcmp.lt.s32.totalorder %v235, 512
        %vm268 = vcmp.lt.s32.totalorder %v236, 512
        %vm269 = vcmp.lt.s32.totalorder %v237, 512
        %vm270 = vcmp.lt.s32.totalorder %v238, 512
        %vm271 = vcmp.lt.s32.totalorder %v239, 512
        %vm272 = vcmp.lt.s32.totalorder %v240, 512
        %v273 = vsel %vm241, %v132, -inf
        %v274 = vsel %vm242, %v133, -inf
        %v275 = vsel %vm243, %v134, -inf
        %v276 = vsel %vm244, %v135, -inf
        %v277 = vsel %vm245, %v136, -inf
        %v278 = vsel %vm246, %v137, -inf
        %v279 = vsel %vm247, %v138, -inf
        %v280 = vsel %vm248, %v139, -inf
        %v281 = vsel %vm249, %v140, -inf
        %v282 = vsel %vm250, %v141, -inf
        %v283 = vsel %vm251, %v142, -inf
        %v284 = vsel %vm252, %v143, -inf
        %v285 = vsel %vm253, %v144, -inf
        %v286 = vsel %vm254, %v145, -inf
        %v287 = vsel %vm255, %v146, -inf
        %v288 = vsel %vm256, %v147, -inf
        %v289 = vsel %vm257, %v148, -inf
        %v290 = vsel %vm258, %v149, -inf
        %v291 = vsel %vm259, %v150, -inf
        %v292 = vsel %vm260, %v151, -inf
        %v293 = vsel %vm261, %v152, -inf
        %v294 = vsel %vm262, %v153, -inf
        %v295 = vsel %vm263, %v154, -inf
        %v296 = vsel %vm264, %v155, -inf
        %v297 = vsel %vm265, %v156, -inf
        %v298 = vsel %vm266, %v157, -inf
        %v299 = vsel %vm267, %v158, -inf
        %v300 = vsel %vm268, %v159, -inf
        %v301 = vsel %vm269, %v160, -inf
        %v302 = vsel %vm270, %v161, -inf
        %v303 = vsel %vm271, %v162, -inf
        %v304 = vsel %vm272, %v163, -inf
        %v305 = vld [vmem:[#allocation2] sm:$0x1]
        %v306 = vmax.f32 %v273, %v277
        %v307 = vmax.f32 %v274, %v278
        %v308 = vmax.f32 %v275, %v279
        %v309 = vmax.f32 %v276, %v280
        %v310 = vmax.f32 %v306, %v281
        %v311 = vmax.f32 %v307, %v282
        %v312 = vmax.f32 %v308, %v283
        %v313 = vmax.f32 %v309, %v284
        %v314 = vmax.f32 %v310, %v285
        %v315 = vmax.f32 %v311, %v286
        %v316 = vmax.f32 %v312, %v287
        %v317 = vmax.f32 %v313, %v288
        %v318 = vmax.f32 %v314, %v289
        %v319 = vmax.f32 %v315, %v290
        %v320 = vmax.f32 %v316, %v291
        %v321 = vmax.f32 %v317, %v292
        %v322 = vmax.f32 %v318, %v293
        %v323 = vmax.f32 %v319, %v294
        %v324 = vmax.f32 %v320, %v295
        %v325 = vmax.f32 %v321, %v296
        %v326 = vmax.f32 %v322, %v297
        %v327 = vmax.f32 %v323, %v298
        %v328 = vmax.f32 %v324, %v299
        %v329 = vmax.f32 %v325, %v300
        %v330 = vmax.f32 %v326, %v301
        %v331 = vmax.f32 %v327, %v302
        %v332 = vmax.f32 %v328, %v303
        %v333 = vmax.f32 %v329, %v304
        %v334 = vmax.f32 %v330, %v331
        %v335 = vmax.f32 %v332, %v333
        %v336 = vmax.f32 %v334, %v335
        %v337 = vrot.slane %v336, 4
        %v338 = vmax.f32 %v336, %v337
        %v339 = vrot.slane %v338, 2
        %v340 = vmax.f32 %v338, %v339
        %v341 = vrot.slane %v340, 1
        %v342 = vmax.f32 %v340, %v341
        %v343 = vmax.f32 %v305, %v342
        %v344 = vld [vmem:[#allocation3] sm:$0x1]
        %v345 = vsub.f32 %v305, %v343
        %v346 = vmul.f32 %v345, 1.442695
        %v347 = vpow.pop %v346
        %v348 = vmul.f32 %v344, %v347
        %v350 = vlaneseq
        %v351 = vshrl.u32 %v350, 7
        %v352 = vsub.s32 0, %v351
        %v353 = vrot.slane %v343, %v352
        %v355 = vsub.f32 %v132, %v353
        %v356 = vsub.f32 %v133, %v353
        %v357 = vsub.f32 %v134, %v353
        %v358 = vsub.f32 %v135, %v353
        %v359 = vsub.f32 %v136, %v353
        %v360 = vsub.f32 %v137, %v353
        %v361 = vsub.f32 %v138, %v353
        %v362 = vsub.f32 %v139, %v353
        %v363 = vsub.f32 %v140, %v353
        %v364 = vsub.f32 %v141, %v353
        %v365 = vsub.f32 %v142, %v353
        %v366 = vsub.f32 %v143, %v353
        %v367 = vsub.f32 %v144, %v353
        %v368 = vsub.f32 %v145, %v353
        %v369 = vsub.f32 %v146, %v353
        %v370 = vsub.f32 %v147, %v353
        %v371 = vsub.f32 %v148, %v353
        %v372 = vsub.f32 %v149, %v353
        %v373 = vsub.f32 %v150, %v353
        %v374 = vsub.f32 %v151, %v353
        %v375 = vsub.f32 %v152, %v353
        %v376 = vsub.f32 %v153, %v353
        %v377 = vsub.f32 %v154, %v353
        %v378 = vsub.f32 %v155, %v353
        %v379 = vsub.f32 %v156, %v353
        %v380 = vsub.f32 %v157, %v353
        %v381 = vsub.f32 %v158, %v353
        %v382 = vsub.f32 %v159, %v353
        %v383 = vsub.f32 %v160, %v353
        %v384 = vsub.f32 %v161, %v353
        %v385 = vsub.f32 %v162, %v353
        %v386 = vsub.f32 %v163, %v353
        %v387 = vmul.f32 %v355, 1.442695
        %v388 = vpow.pop %v387
        %v389 = vmul.f32 %v356, 1.442695
        %v390 = vpow.pop %v389
        %v391 = vmul.f32 %v357, 1.442695
        %v392 = vpow.pop %v391
        %v393 = vmul.f32 %v358, 1.442695
        %v394 = vpow.pop %v393
        %v395 = vmul.f32 %v359, 1.442695
        %v396 = vpow.pop %v395
        %v397 = vmul.f32 %v360, 1.442695
        %v398 = vpow.pop %v397
        %v399 = vmul.f32 %v361, 1.442695
        %v400 = vpow.pop %v399
        %v401 = vmul.f32 %v362, 1.442695
        %v402 = vpow.pop %v401
        %v403 = vmul.f32 %v363, 1.442695
        %v404 = vpow.pop %v403
        %v405 = vmul.f32 %v364, 1.442695
        %v406 = vpow.pop %v405
        %v407 = vmul.f32 %v365, 1.442695
        %v408 = vpow.pop %v407
        %v409 = vmul.f32 %v366, 1.442695
        %v410 = vpow.pop %v409
        %v411 = vmul.f32 %v367, 1.442695
        %v412 = vpow.pop %v411
        %v413 = vmul.f32 %v368, 1.442695
        %v414 = vpow.pop %v413
        %v415 = vmul.f32 %v369, 1.442695
        %v416 = vpow.pop %v415
        %v417 = vmul.f32 %v370, 1.442695
        %v418 = vpow.pop %v417
        %v419 = vmul.f32 %v371, 1.442695
        %v420 = vpow.pop %v419
        %v421 = vmul.f32 %v372, 1.442695
        %v422 = vpow.pop %v421
        %v423 = vmul.f32 %v373, 1.442695
        %v424 = vpow.pop %v423
        %v425 = vmul.f32 %v374, 1.442695
        %v426 = vpow.pop %v425
        %v427 = vmul.f32 %v375, 1.442695
        %v428 = vpow.pop %v427
        %v429 = vmul.f32 %v376, 1.442695
        %v430 = vpow.pop %v429
        %v431 = vmul.f32 %v377, 1.442695
        %v432 = vpow.pop %v431
        %v433 = vmul.f32 %v378, 1.442695
        %v434 = vpow.pop %v433
        %v435 = vmul.f32 %v379, 1.442695
        %v436 = vpow.pop %v435
        %v437 = vmul.f32 %v380, 1.442695
        %v438 = vpow.pop %v437
        %v439 = vmul.f32 %v381, 1.442695
        %v440 = vpow.pop %v439
        %v441 = vmul.f32 %v382, 1.442695
        %v442 = vpow.pop %v441
        %v443 = vmul.f32 %v383, 1.442695
        %v444 = vpow.pop %v443
        %v445 = vmul.f32 %v384, 1.442695
        %v446 = vpow.pop %v445
        %v447 = vmul.f32 %v385, 1.442695
        %v448 = vpow.pop %v447
        %v449 = vmul.f32 %v386, 1.442695
        %v450 = vpow.pop %v449
        %v451 = vsel %vm241, %v388, 0.0
        %v452 = vsel %vm242, %v390, 0.0
        %v453 = vsel %vm243, %v392, 0.0
        %v454 = vsel %vm244, %v394, 0.0
        %v455 = vsel %vm245, %v396, 0.0
        %v456 = vsel %vm246, %v398, 0.0
        %v457 = vsel %vm247, %v400, 0.0
        %v458 = vsel %vm248, %v402, 0.0
        %v459 = vsel %vm249, %v404, 0.0
        %v460 = vsel %vm250, %v406, 0.0
        %v461 = vsel %vm251, %v408, 0.0
        %v462 = vsel %vm252, %v410, 0.0
        %v463 = vsel %vm253, %v412, 0.0
        %v464 = vsel %vm254, %v414, 0.0
        %v465 = vsel %vm255, %v416, 0.0
        %v466 = vsel %vm256, %v418, 0.0
        %v467 = vsel %vm257, %v420, 0.0
        %v468 = vsel %vm258, %v422, 0.0
        %v469 = vsel %vm259, %v424, 0.0
        %v470 = vsel %vm260, %v426, 0.0
        %v471 = vsel %vm261, %v428, 0.0
        %v472 = vsel %vm262, %v430, 0.0
        %v473 = vsel %vm263, %v432, 0.0
        %v474 = vsel %vm264, %v434, 0.0
        %v475 = vsel %vm265, %v436, 0.0
        %v476 = vsel %vm266, %v438, 0.0
        %v477 = vsel %vm267, %v440, 0.0
        %v478 = vsel %vm268, %v442, 0.0
        %v479 = vsel %vm269, %v444, 0.0
        %v480 = vsel %vm270, %v446, 0.0
        %v481 = vsel %vm271, %v448, 0.0
        %v482 = vsel %vm272, %v450, 0.0
        %v483 = vadd.f32 %v451, %v452
        %v484 = vadd.f32 %v483, %v453
        %v485 = vadd.f32 %v484, %v454
        %v486 = vadd.f32 %v485, %v455
        %v487 = vadd.f32 %v486, %v456
        %v488 = vadd.f32 %v487, %v457
        %v489 = vadd.f32 %v488, %v458
        %v490 = vadd.f32 %v489, %v459
        %v491 = vadd.f32 %v490, %v460
        %v492 = vadd.f32 %v491, %v461
        %v493 = vadd.f32 %v492, %v462
        %v494 = vadd.f32 %v493, %v463
        %v495 = vadd.f32 %v494, %v464
        %v496 = vadd.f32 %v495, %v465
        %v497 = vadd.f32 %v496, %v466
        %v498 = vadd.f32 %v497, %v467
        %v499 = vadd.f32 %v498, %v468
        %v500 = vadd.f32 %v499, %v469
        %v501 = vadd.f32 %v500, %v470
        %v502 = vadd.f32 %v501, %v471
        %v503 = vadd.f32 %v502, %v472
        %v504 = vadd.f32 %v503, %v473
        %v505 = vadd.f32 %v504, %v474
        %v506 = vadd.f32 %v505, %v475
        %v507 = vadd.f32 %v506, %v476
        %v508 = vadd.f32 %v507, %v477
        %v509 = vadd.f32 %v508, %v478
        %v510 = vadd.f32 %v509, %v479
        %v511 = vadd.f32 %v510, %v480
        %v512 = vadd.f32 %v511, %v481
        %v513 = vadd.f32 %v512, %v482
        %v514 = vrot.slane %v513, 4
        %v515 = vadd.f32 %v513, %v514
        %v516 = vrot.slane %v515, 2
        %v517 = vadd.f32 %v515, %v516
        %v518 = vrot.slane %v517, 1
        %v519 = vadd.f32 %v517, %v518
        %v520 = vadd.f32 %v348, %v519
        %521 = vst [vmem:[#allocation3] sm:$0x1] %v520
        %522 = vst [vmem:[#allocation2] sm:$0x1] %v343
        %523 = vst [vmem:[%s130] sm:$0xff] %v132
        %524 = vst [vmem:[%s130 + $0x8] sm:$0xff] %v133
        %525 = vst [vmem:[%s130 + $0x10] sm:$0xff] %v134
        %526 = vst [vmem:[%s130 + $0x18] sm:$0xff] %v135
        %527 = vst [vmem:[%s130 + $0x20] sm:$0xff] %v136
        %528 = vst [vmem:[%s130 + $0x28] sm:$0xff] %v137
        %529 = vst [vmem:[%s130 + $0x30] sm:$0xff] %v138
        %530 = vst [vmem:[%s130 + $0x38] sm:$0xff] %v139
        %531 = vst [vmem:[%s130 + $0x40] sm:$0xff] %v140
        %532 = vst [vmem:[%s130 + $0x48] sm:$0xff] %v141
        %533 = vst [vmem:[%s130 + $0x50] sm:$0xff] %v142
        %534 = vst [vmem:[%s130 + $0x58] sm:$0xff] %v143
        %535 = vst [vmem:[%s130 + $0x60] sm:$0xff] %v144
        %536 = vst [vmem:[%s130 + $0x68] sm:$0xff] %v145
        %537 = vst [vmem:[%s130 + $0x70] sm:$0xff] %v146
        %538 = vst [vmem:[%s130 + $0x78] sm:$0xff] %v147
        %539 = vst [vmem:[%s130 + $0x80] sm:$0xff] %v148
        %540 = vst [vmem:[%s130 + $0x88] sm:$0xff] %v149
        %541 = vst [vmem:[%s130 + $0x90] sm:$0xff] %v150
        %542 = vst [vmem:[%s130 + $0x98] sm:$0xff] %v151
        %543 = vst [vmem:[%s130 + $0xa0] sm:$0xff] %v152
        %544 = vst [vmem:[%s130 + $0xa8] sm:$0xff] %v153
        %545 = vst [vmem:[%s130 + $0xb0] sm:$0xff] %v154
        %546 = vst [vmem:[%s130 + $0xb8] sm:$0xff] %v155
        %547 = vst [vmem:[%s130 + $0xc0] sm:$0xff] %v156
        %548 = vst [vmem:[%s130 + $0xc8] sm:$0xff] %v157
        %549 = vst [vmem:[%s130 + $0xd0] sm:$0xff] %v158
        %550 = vst [vmem:[%s130 + $0xd8] sm:$0xff] %v159
        %551 = vst [vmem:[%s130 + $0xe0] sm:$0xff] %v160
        %552 = vst [vmem:[%s130 + $0xe8] sm:$0xff] %v161
        %553 = vst [vmem:[%s130 + $0xf0] sm:$0xff] %v162
        %554 = vst [vmem:[%s130 + $0xf8] sm:$0xff] %v163
      $region28: #{firstnet_forward.3} parent=23 // pred_fallthru
        _
      %p555 = scmp.eq.s32.totalorder %s16, 1
      // Predicated region
      $region33: #{firstnet_forward.3} parent=23 // pred_check
        %p556 = pneg %p555
      $region34: #{firstnet_forward.3} parent=23 // pred_check_branch
        %558 = sbr.rel (%p556) target = $region36
      $region35: #{firstnet_forward.3} parent=23 // pred_region
        %v559 = vld [vmem:[#allocation2] sm:$0x1]
        %v560 = vld [vmem:[#allocation3] sm:$0x1]
        %v561 = vlog2.pop %v560
        %v562 = vmul.f32 %v561, 0.6931472
        %v563 = vadd.f32 %v559, %v562
        %v565 = vlaneseq
        %v566 = vshrl.u32 %v565, 7
        %v567 = vsub.s32 0, %v566
        %v568 = vrot.slane %v563, %v567
        %v570 = vsub.f32 %v132, %v568
        %v571 = vsub.f32 %v133, %v568
        %v572 = vsub.f32 %v134, %v568
        %v573 = vsub.f32 %v135, %v568
        %v574 = vsub.f32 %v136, %v568
        %v575 = vsub.f32 %v137, %v568
        %v576 = vsub.f32 %v138, %v568
        %v577 = vsub.f32 %v139, %v568
        %v578 = vsub.f32 %v140, %v568
        %v579 = vsub.f32 %v141, %v568
        %v580 = vsub.f32 %v142, %v568
        %v581 = vsub.f32 %v143, %v568
        %v582 = vsub.f32 %v144, %v568
        %v583 = vsub.f32 %v145, %v568
        %v584 = vsub.f32 %v146, %v568
        %v585 = vsub.f32 %v147, %v568
        %v586 = vsub.f32 %v148, %v568
        %v587 = vsub.f32 %v149, %v568
        %v588 = vsub.f32 %v150, %v568
        %v589 = vsub.f32 %v151, %v568
        %v590 = vsub.f32 %v152, %v568
        %v591 = vsub.f32 %v153, %v568
        %v592 = vsub.f32 %v154, %v568
        %v593 = vsub.f32 %v155, %v568
        %v594 = vsub.f32 %v156, %v568
        %v595 = vsub.f32 %v157, %v568
        %v596 = vsub.f32 %v158, %v568
        %v597 = vsub.f32 %v159, %v568
        %v598 = vsub.f32 %v160, %v568
        %v599 = vsub.f32 %v161, %v568
        %v600 = vsub.f32 %v162, %v568
        %v601 = vsub.f32 %v163, %v568
        %602 = vst [vmem:[%s130] sm:$0xff] %v570
        %603 = vst [vmem:[%s130 + $0x8] sm:$0xff] %v571
        %604 = vst [vmem:[%s130 + $0x10] sm:$0xff] %v572
        %605 = vst [vmem:[%s130 + $0x18] sm:$0xff] %v573
        %606 = vst [vmem:[%s130 + $0x20] sm:$0xff] %v574
        %607 = vst [vmem:[%s130 + $0x28] sm:$0xff] %v575
        %608 = vst [vmem:[%s130 + $0x30] sm:$0xff] %v576
        %609 = vst [vmem:[%s130 + $0x38] sm:$0xff] %v577
        %610 = vst [vmem:[%s130 + $0x40] sm:$0xff] %v578
        %611 = vst [vmem:[%s130 + $0x48] sm:$0xff] %v579
        %612 = vst [vmem:[%s130 + $0x50] sm:$0xff] %v580
        %613 = vst [vmem:[%s130 + $0x58] sm:$0xff] %v581
        %614 = vst [vmem:[%s130 + $0x60] sm:$0xff] %v582
        %615 = vst [vmem:[%s130 + $0x68] sm:$0xff] %v583
        %616 = vst [vmem:[%s130 + $0x70] sm:$0xff] %v584
        %617 = vst [vmem:[%s130 + $0x78] sm:$0xff] %v585
        %618 = vst [vmem:[%s130 + $0x80] sm:$0xff] %v586
        %619 = vst [vmem:[%s130 + $0x88] sm:$0xff] %v587
        %620 = vst [vmem:[%s130 + $0x90] sm:$0xff] %v588
        %621 = vst [vmem:[%s130 + $0x98] sm:$0xff] %v589
        %622 = vst [vmem:[%s130 + $0xa0] sm:$0xff] %v590
        %623 = vst [vmem:[%s130 + $0xa8] sm:$0xff] %v591
        %624 = vst [vmem:[%s130 + $0xb0] sm:$0xff] %v592
        %625 = vst [vmem:[%s130 + $0xb8] sm:$0xff] %v593
        %626 = vst [vmem:[%s130 + $0xc0] sm:$0xff] %v594
        %627 = vst [vmem:[%s130 + $0xc8] sm:$0xff] %v595
        %628 = vst [vmem:[%s130 + $0xd0] sm:$0xff] %v596
        %629 = vst [vmem:[%s130 + $0xd8] sm:$0xff] %v597
        %630 = vst [vmem:[%s130 + $0xe0] sm:$0xff] %v598
        %631 = vst [vmem:[%s130 + $0xe8] sm:$0xff] %v599
        %632 = vst [vmem:[%s130 + $0xf0] sm:$0xff] %v600
        %633 = vst [vmem:[%s130 + $0xf8] sm:$0xff] %v601
      $region36: #{firstnet_forward.3} parent=23 // pred_fallthru
        _
      %s634 = smul.u32 32, %s17
      %p635 = scmp.lt.s32.totalorder %s634, 63
      %s636 = scalar_select %p635, %s634, 63
      %s637 = smul.addr %s636, 8
      %s638 = scalar_lea.vmem %s1, %s637
      // Predicated region
      $region37: #{firstnet_forward.3} parent=23 // pred_check
        %p639 = pneg %p68
      $region38: #{firstnet_forward.3} parent=23 // pred_check_branch
        %641 = sbr.rel (%p639) target = $region40
      $region39: #{firstnet_forward.3} parent=23 // pred_region
        %s642 = smul.u32 32, %s17
      $region40: #{firstnet_forward.3} parent=23 // pred_fallthru
        _
    $region24: #{firstnet_forward.3} parent=5 // pred_fallthru
      _
    %p643 = scmp.le.s32.totalorder 2, %s7
    // Predicated region
    $region41: #{firstnet_forward.3} parent=5 // pred_check
      %p644 = pneg %p643
    $region42: #{firstnet_forward.3} parent=5 // pred_check_branch
      %646 = sbr.rel (%p644) target = $region44
    $region43: #{firstnet_forward.3} parent=5 // pred_region
      %s647 = ssub.s32 %s7, 2
      // Predicated region
      $region45: #{firstnet_forward.3} parent=43 // pred_check
        %p648 = pneg %p74
      $region46: #{firstnet_forward.3} parent=43 // pred_check_branch
        %650 = sbr.rel (%p648) target = $region48
      $region47: #{firstnet_forward.3} parent=43 // pred_region
        %s651 = smul.u32 32, %s19
        %p652 = scmp.lt.s32.totalorder %s651, 63
        %s653 = scalar_select %p652, %s651, 63
        %s654 = smul.addr %s653, 8
        %s655 = scalar_lea.vmem %s1, %s654
      $region48: #{firstnet_forward.3} parent=43 // pred_fallthru
        _
    $region44: #{firstnet_forward.3} parent=5 // pred_fallthru
      _
  $region6: #{firstnet_forward.3} parent=0 // loop_footer
    %s11 = sadd.s32 1, %s7
  $region7: #{firstnet_forward.3} parent=0 // loop_footer_branch
    %6 = sbr.rel target = $region3
  $region8: #{firstnet_forward.3} parent=0 // loop_exit
    _

// kernel: firstnet_forward.2
$region0: #{firstnet_forward.2}
  #allocation0 [shape = 'u32[]', space=smem, size = 0x4, offset = 0x4, fixed_abs, tag = 'smem constant byte address 0x4 - core index']
  #allocation1 [shape = 'u32[144,128]{1,0:T(1,128)}', space=vmem, size = 0x12000, scoped, tag = 'internal scratch']
  %s0 = inlined_call_operand.vmem [shape: bf16[512,256], index: 0, kind: input, shape index: {}]
  %s1 = inlined_call_operand.vmem [shape: bf16[512,128], index: 1, kind: input, shape index: {}]
  %s2 = inlined_call_operand.vmem [shape: f32[3,128], index: 2, kind: input, shape index: {}]
  %s3 = inlined_call_operand.vmem [shape: f32[512,128], index: 3, kind: output, shape index: {}]
  %s4 = sld [smem:[#allocation0]]
  $region45: #{firstnet_forward.2} parent=0
    _
  %s6 = ssub.s32 1, %s4
  %s7 = scalar_select 0, %s6, %s4
  loop: start=0, step=1, limit=4
  $region2: #{firstnet_forward.2} parent=0 // loop_pre_header
    _
  $region3: #{firstnet_forward.2} parent=0 // loop_header
    %s9 = sphi 0, %s13
    %p10 = scmp.ge.s32.totalorder %s9, 4
    %s19 = sphi 0, %s21
    %s22 = sphi 0, %s19
    %s23 = sphi 0, %s22
    %s39 = sphi 0, %s23
    %s43 = sphi 0, %s43
    %s45 = sphi 0, %s43
    %s46 = sphi 0, %s45
    %s60 = sphi 0, %s46
    %s64 = sphi 0, %s64
    %s66 = sphi 0, %s64
    %s67 = sphi 0, %s66
    %s81 = sphi 0, %s67
    %s87 = sphi 0, %s89
    %s90 = sphi 0, %s87
    %s91 = sphi 0, %s90
    %s107 = sphi 0, %s91
  $region4: #{firstnet_forward.2} parent=0 // loop_header_branch
    %12 = sbr.rel (%p10) target = $region8
  $region5: #{firstnet_forward.2} parent=0 // loop_body
    %s14 = ssub.s32 %s9, 1
    %s15 = ssub.s32 %s9, 2
    %s16 = sadd.s32 %s9, 1
    %s17 = ssub.s32 %s9, %s16
    %p18 = scmp.eq.s32.totalorder %s17, 0
    %s20 = sadd.s32 %s19, 1
    %s21 = scalar_select %p18, %s19, %s20
    %p24 = pneg %p18
    %p25 = scmp.eq.s32.totalorder %s9, 1
    %p26 = por %p24, %p25
    %p27 = scmp.ne.s32.totalorder %s19, %s22
    %p28 = scmp.eq.s32.totalorder %s9, 0
    %p29 = por %p27, %p28
    %p30 = scmp.ne.s32.totalorder %s19, %s22
    %p31 = scmp.eq.s32.totalorder %s14, 1
    %p32 = por %p30, %p31
    %p33 = scmp.ne.s32.totalorder %s22, %s23
    %p34 = scmp.eq.s32.totalorder %s14, 0
    %p35 = por %p33, %p34
    %p36 = scmp.ne.s32.totalorder %s22, %s23
    %p37 = scmp.eq.s32.totalorder %s15, 1
    %p38 = por %p36, %p37
    %p40 = scmp.ne.s32.totalorder %s23, %s39
    %p41 = scmp.eq.s32.totalorder %s15, 0
    %p42 = por %p40, %p41
    %s44 = sadd.s32 %s43, 1
    %p47 = scmp.eq.s32.totalorder %s9, 1
    %p48 = scmp.ne.s32.totalorder %s43, %s45
    %p49 = scmp.eq.s32.totalorder %s9, 0
    %p50 = por %p48, %p49
    %p51 = scmp.ne.s32.totalorder %s43, %s45
    %p52 = scmp.eq.s32.totalorder %s14, 1
    %p53 = por %p51, %p52
    %p54 = scmp.ne.s32.totalorder %s45, %s46
    %p55 = scmp.eq.s32.totalorder %s14, 0
    %p56 = por %p54, %p55
    %p57 = scmp.ne.s32.totalorder %s45, %s46
    %p58 = scmp.eq.s32.totalorder %s15, 1
    %p59 = por %p57, %p58
    %p61 = scmp.ne.s32.totalorder %s46, %s60
    %p62 = scmp.eq.s32.totalorder %s15, 0
    %p63 = por %p61, %p62
    %s65 = sadd.s32 %s64, 1
    %p68 = scmp.eq.s32.totalorder %s9, 1
    %p69 = scmp.ne.s32.totalorder %s64, %s66
    %p70 = scmp.eq.s32.totalorder %s9, 0
    %p71 = por %p69, %p70
    %p72 = scmp.ne.s32.totalorder %s64, %s66
    %p73 = scmp.eq.s32.totalorder %s14, 1
    %p74 = por %p72, %p73
    %p75 = scmp.ne.s32.totalorder %s66, %s67
    %p76 = scmp.eq.s32.totalorder %s14, 0
    %p77 = por %p75, %p76
    %p78 = scmp.ne.s32.totalorder %s66, %s67
    %p79 = scmp.eq.s32.totalorder %s15, 1
    %p80 = por %p78, %p79
    %p82 = scmp.ne.s32.totalorder %s67, %s81
    %p83 = scmp.eq.s32.totalorder %s15, 0
    %p84 = por %p82, %p83
    %s85 = ssub.s32 %s9, %s16
    %p86 = scmp.eq.s32.totalorder %s85, 0
    %s88 = sadd.s32 %s87, 1
    %s89 = scalar_select %p86, %s87, %s88
    %p92 = pneg %p86
    %p93 = scmp.eq.s32.totalorder %s9, 1
    %p94 = por %p92, %p93
    %p95 = scmp.ne.s32.totalorder %s87, %s90
    %p96 = scmp.eq.s32.totalorder %s9, 0
    %p97 = por %p95, %p96
    %p98 = scmp.ne.s32.totalorder %s87, %s90
    %p99 = scmp.eq.s32.totalorder %s14, 1
    %p100 = por %p98, %p99
    %p101 = scmp.ne.s32.totalorder %s90, %s91
    %p102 = scmp.eq.s32.totalorder %s14, 0
    %p103 = por %p101, %p102
    %p104 = scmp.ne.s32.totalorder %s90, %s91
    %p105 = scmp.eq.s32.totalorder %s15, 1
    %p106 = por %p104, %p105
    %p108 = scmp.ne.s32.totalorder %s91, %s107
    %p109 = scmp.eq.s32.totalorder %s15, 0
    %p110 = por %p108, %p109
    %p111 = scmp.le.s32.totalorder 1, %s9
    %p112 = scmp.lt.s32.totalorder %s9, 3
    %p113 = pnand %p111, %p112
    %p114 = pneg %p113
    // Predicated region
    $region9: #{firstnet_forward.2} parent=5 // pred_check
      _
    $region10: #{firstnet_forward.2} parent=5 // pred_check_branch
      %116 = sbr.rel (%p113) target = $region12
    $region11: #{firstnet_forward.2} parent=5 // pred_region
      %s117 = ssub.s32 %s9, 1
      // Predicated region
      $region13: #{firstnet_forward.2} parent=11 // pred_check
        %p118 = pneg %p56
      $region14: #{firstnet_forward.2} parent=11 // pred_check_branch
        %120 = sbr.rel (%p118) target = $region16
      $region15: #{firstnet_forward.2} parent=11 // pred_region
        _
      $region16: #{firstnet_forward.2} parent=11 // pred_fallthru
        _
      // Predicated region
      $region17: #{firstnet_forward.2} parent=11 // pred_check
        %p121 = pneg %p77
      $region18: #{firstnet_forward.2} parent=11 // pred_check_branch
        %123 = sbr.rel (%p121) target = $region20
      $region19: #{firstnet_forward.2} parent=11 // pred_region
        _
      $region20: #{firstnet_forward.2} parent=11 // pred_fallthru
        _
    $region12: #{firstnet_forward.2} parent=5 // pred_fallthru
      _
    %p124 = scmp.lt.s32.totalorder %s9, 2
    // Predicated region
    $region21: #{firstnet_forward.2} parent=5 // pred_check
      %p125 = pneg %p124
    $region22: #{firstnet_forward.2} parent=5 // pred_check_branch
      %127 = sbr.rel (%p125) target = $region24
    $region23: #{firstnet_forward.2} parent=5 // pred_region
      // Predicated region
      $region25: #{firstnet_forward.2} parent=23 // pred_check
        %p128 = pneg %p29
      $region26: #{firstnet_forward.2} parent=23 // pred_check_branch
        %130 = sbr.rel (%p128) target = $region28
      $region27: #{firstnet_forward.2} parent=23 // pred_region
        %s131 = smul.u32 32, %s9
        %p132 = scmp.lt.s32.totalorder %s131, 63
        %s133 = scalar_select %p132, %s131, 63
        %s134 = smul.addr %s133, 2
        %s135 = smul.addr %s134, 4
        %s136 = scalar_lea.vmem %s0, %s135
        %s137 = smul.u32 32, %s9
      $region28: #{firstnet_forward.2} parent=23 // pred_fallthru
        _
    $region24: #{firstnet_forward.2} parent=5 // pred_fallthru
      _
    %p138 = scmp.le.s32.totalorder 1, %s9
    %p139 = scmp.lt.s32.totalorder %s9, 3
    %p140 = pnand %p138, %p139
    %p141 = pneg %p140
    // Predicated region
    $region29: #{firstnet_forward.2} parent=5 // pred_check
      _
    $region30: #{firstnet_forward.2} parent=5 // pred_check_branch
      %143 = sbr.rel (%p140) target = $region32
    $region31: #{firstnet_forward.2} parent=5 // pred_region
      %s144 = ssub.s32 %s9, 1
      %s145 = smul.u32 32, %s14
      %p146 = scmp.lt.s32.totalorder %s145, 63
      %s147 = scalar_select %p146, %s145, 63
      %s148 = smul.addr %s147, 2
      %s149 = smul.addr %s148, 4
      %s150 = scalar_lea.vmem %s0, %s149
      %p151 = pneg %p35
      %p152 = pneg %p32
      %p153 = pneg %p56
      %p154 = pneg %p53
      %p155 = pneg %p77
      %p156 = pneg %p74
      %p157 = pneg %p103
      %p158 = pneg %p100
      %s159 = smul.u32 32, %s14
      %p160 = scmp.lt.s32.totalorder %s159, 63
      %s161 = scalar_select %p160, %s159, 63
      %s162 = smul.addr %s161, 8
      %s163 = scalar_lea.vmem %s3, %s162
      %s164 = smul.u32 32, %s14
      %p165 = scmp.lt.s32.totalorder %s164, 63
      %s166 = scalar_select %p165, %s164, 63
      %s167 = smul.addr %s166, 2
      %s168 = smul.addr %s167, 4
      %s169 = scalar_lea.vmem %s0, %s168
      %s170 = smul.u32 32, %s14
      %s171 = smul.u32 32, %s14
      %p172 = scmp.lt.s32.totalorder %s171, 63
      %s173 = scalar_select %p172, %s171, 63
      %s174 = smul.addr %s173, 8
      %s175 = scalar_lea.vmem %s3, %s174
      %s176 = smul.u32 32, %s14
      %v178 = vld [vmem:[%s169] sm:$0xff]
      %v179 = vld [vmem:[%s169 + $0x8] sm:$0xff]
      %v180 = vld [vmem:[%s169 + $0x10] sm:$0xff]
      %v181 = vld [vmem:[%s169 + $0x18] sm:$0xff]
      %v182 = vld [vmem:[%s169 + $0x20] sm:$0xff]
      %v183 = vld [vmem:[%s169 + $0x28] sm:$0xff]
      %v184 = vld [vmem:[%s169 + $0x30] sm:$0xff]
      %v185 = vld [vmem:[%s169 + $0x38] sm:$0xff]
      %v186 = vld [vmem:[%s169 + $0x40] sm:$0xff]
      %v187 = vld [vmem:[%s169 + $0x48] sm:$0xff]
      %v188 = vld [vmem:[%s169 + $0x50] sm:$0xff]
      %v189 = vld [vmem:[%s169 + $0x58] sm:$0xff]
      %v190 = vld [vmem:[%s169 + $0x60] sm:$0xff]
      %v191 = vld [vmem:[%s169 + $0x68] sm:$0xff]
      %v192 = vld [vmem:[%s169 + $0x70] sm:$0xff]
      %v193 = vld [vmem:[%s169 + $0x78] sm:$0xff]
      %v194 = vld [vmem:[%s169 + $0x80] sm:$0xff]
      %v195 = vld [vmem:[%s169 + $0x88] sm:$0xff]
      %v196 = vld [vmem:[%s169 + $0x90] sm:$0xff]
      %v197 = vld [vmem:[%s169 + $0x98] sm:$0xff]
      %v198 = vld [vmem:[%s169 + $0xa0] sm:$0xff]
      %v199 = vld [vmem:[%s169 + $0xa8] sm:$0xff]
      %v200 = vld [vmem:[%s169 + $0xb0] sm:$0xff]
      %v201 = vld [vmem:[%s169 + $0xb8] sm:$0xff]
      %v202 = vld [vmem:[%s169 + $0xc0] sm:$0xff]
      %v203 = vld [vmem:[%s169 + $0xc8] sm:$0xff]
      %v204 = vld [vmem:[%s169 + $0xd0] sm:$0xff]
      %v205 = vld [vmem:[%s169 + $0xd8] sm:$0xff]
      %v206 = vld [vmem:[%s169 + $0xe0] sm:$0xff]
      %v207 = vld [vmem:[%s169 + $0xe8] sm:$0xff]
      %v208 = vld [vmem:[%s169 + $0xf0] sm:$0xff]
      %v209 = vld [vmem:[%s169 + $0xf8] sm:$0xff]
      %v210 = vld [vmem:[%s1] sm:$0xf]
      %v211 = vld [vmem:[%s1 + $0x4] sm:$0xf]
      %v212 = vld [vmem:[%s1 + $0x8] sm:$0xf]
      %v213 = vld [vmem:[%s1 + $0xc] sm:$0xf]
      %v214 = vld [vmem:[%s1 + $0x10] sm:$0xf]
      %v215 = vld [vmem:[%s1 + $0x14] sm:$0xf]
      %v216 = vld [vmem:[%s1 + $0x18] sm:$0xf]
      %v217 = vld [vmem:[%s1 + $0x1c] sm:$0xf]
      %v218 = vld [vmem:[%s1 + $0x20] sm:$0xf]
      %v219 = vld [vmem:[%s1 + $0x24] sm:$0xf]
      %v220 = vld [vmem:[%s1 + $0x28] sm:$0xf]
      %v221 = vld [vmem:[%s1 + $0x2c] sm:$0xf]
      %v222 = vld [vmem:[%s1 + $0x30] sm:$0xf]
      %v223 = vld [vmem:[%s1 + $0x34] sm:$0xf]
      %v224 = vld [vmem:[%s1 + $0x38] sm:$0xf]
      %v225 = vld [vmem:[%s1 + $0x3c] sm:$0xf]
      %v226 = vld [vmem:[%s1 + $0x40] sm:$0xf]
      %v227 = vld [vmem:[%s1 + $0x44] sm:$0xf]
      %v228 = vld [vmem:[%s1 + $0x48] sm:$0xf]
      %v229 = vld [vmem:[%s1 + $0x4c] sm:$0xf]
      %v230 = vld [vmem:[%s1 + $0x50] sm:$0xf]
      %v231 = vld [vmem:[%s1 + $0x54] sm:$0xf]
      %v232 = vld [vmem:[%s1 + $0x58] sm:$0xf]
      %v233 = vld [vmem:[%s1 + $0x5c] sm:$0xf]
      %v234 = vld [vmem:[%s1 + $0x60] sm:$0xf]
      %v235 = vld [vmem:[%s1 + $0x64] sm:$0xf]
      %v236 = vld [vmem:[%s1 + $0x68] sm:$0xf]
      %v237 = vld [vmem:[%s1 + $0x6c] sm:$0xf]
      %v238 = vld [vmem:[%s1 + $0x70] sm:$0xf]
      %v239 = vld [vmem:[%s1 + $0x74] sm:$0xf]
      %v240 = vld [vmem:[%s1 + $0x78] sm:$0xf]
      %v241 = vld [vmem:[%s1 + $0x7c] sm:$0xf]
      %v242 = vld [vmem:[%s2] sm:$0x1]
      %v243 = vlaneseq
      %v244 = vshrl.u32 %v243, 7
      %v245 = vsub.s32 0, %v244
      %v246 = vrot.slane %v242, %v245
      %v279 = vunpack.c.l.b16 %v178
      %v280 = vunpack.c.h.b16 %v178
      %v281 = vunpack.c.l.b16 %v179
      %v282 = vunpack.c.h.b16 %v179
      %v283 = vunpack.c.l.b16 %v180
      %v284 = vunpack.c.h.b16 %v180
      %v285 = vunpack.c.l.b16 %v181
      %v286 = vunpack.c.h.b16 %v181
      %v287 = vunpack.c.l.b16 %v182
      %v288 = vunpack.c.h.b16 %v182
      %v289 = vunpack.c.l.b16 %v183
      %v290 = vunpack.c.h.b16 %v183
      %v291 = vunpack.c.l.b16 %v184
      %v292 = vunpack.c.h.b16 %v184
      %v293 = vunpack.c.l.b16 %v185
      %v294 = vunpack.c.h.b16 %v185
      %v295 = vunpack.c.l.b16 %v186
      %v296 = vunpack.c.h.b16 %v186
      %v297 = vunpack.c.l.b16 %v187
      %v298 = vunpack.c.h.b16 %v187
      %v299 = vunpack.c.l.b16 %v188
      %v300 = vunpack.c.h.b16 %v188
      %v301 = vunpack.c.l.b16 %v189
      %v302 = vunpack.c.h.b16 %v189
      %v303 = vunpack.c.l.b16 %v190
      %v304 = vunpack.c.h.b16 %v190
      %v305 = vunpack.c.l.b16 %v191
      %v306 = vunpack.c.h.b16 %v191
      %v307 = vunpack.c.l.b16 %v192
      %v308 = vunpack.c.h.b16 %v192
      %v309 = vunpack.c.l.b16 %v193
      %v310 = vunpack.c.h.b16 %v193
      %v311 = vunpack.c.l.b16 %v194
      %v312 = vunpack.c.h.b16 %v194
      %v313 = vunpack.c.l.b16 %v195
      %v314 = vunpack.c.h.b16 %v195
      %v315 = vunpack.c.l.b16 %v196
      %v316 = vunpack.c.h.b16 %v196
      %v317 = vunpack.c.l.b16 %v197
      %v318 = vunpack.c.h.b16 %v197
      %v319 = vunpack.c.l.b16 %v198
      %v320 = vunpack.c.h.b16 %v198
      %v321 = vunpack.c.l.b16 %v199
      %v322 = vunpack.c.h.b16 %v199
      %v323 = vunpack.c.l.b16 %v200
      %v324 = vunpack.c.h.b16 %v200
      %v325 = vunpack.c.l.b16 %v201
      %v326 = vunpack.c.h.b16 %v201
      %v327 = vunpack.c.l.b16 %v202
      %v328 = vunpack.c.h.b16 %v202
      %v329 = vunpack.c.l.b16 %v203
      %v330 = vunpack.c.h.b16 %v203
      %v331 = vunpack.c.l.b16 %v204
      %v332 = vunpack.c.h.b16 %v204
      %v333 = vunpack.c.l.b16 %v205
      %v334 = vunpack.c.h.b16 %v205
      %v335 = vunpack.c.l.b16 %v206
      %v336 = vunpack.c.h.b16 %v206
      %v337 = vunpack.c.l.b16 %v207
      %v338 = vunpack.c.h.b16 %v207
      %v339 = vunpack.c.l.b16 %v208
      %v340 = vunpack.c.h.b16 %v208
      %v341 = vunpack.c.l.b16 %v209
      %v342 = vunpack.c.h.b16 %v209
      %v343 = vpack.c.b16 %v281, %v279
      %v344 = vpack.c.b16 %v282, %v280
      %v345 = vpack.c.b16 %v285, %v283
      %v346 = vpack.c.b16 %v286, %v284
      %v347 = vpack.c.b16 %v289, %v287
      %v348 = vpack.c.b16 %v290, %v288
      %v349 = vpack.c.b16 %v293, %v291
      %v350 = vpack.c.b16 %v294, %v292
      %v351 = vpack.c.b16 %v297, %v295
      %v352 = vpack.c.b16 %v298, %v296
      %v353 = vpack.c.b16 %v301, %v299
      %v354 = vpack.c.b16 %v302, %v300
      %v355 = vpack.c.b16 %v305, %v303
      %v356 = vpack.c.b16 %v306, %v304
      %v357 = vpack.c.b16 %v309, %v307
      %v358 = vpack.c.b16 %v310, %v308
      %v359 = vpack.c.b16 %v313, %v311
      %v360 = vpack.c.b16 %v314, %v312
      %v361 = vpack.c.b16 %v317, %v315
      %v362 = vpack.c.b16 %v318, %v316
      %v363 = vpack.c.b16 %v321, %v319
      %v364 = vpack.c.b16 %v322, %v320
      %v365 = vpack.c.b16 %v325, %v323
      %v366 = vpack.c.b16 %v326, %v324
      %v367 = vpack.c.b16 %v329, %v327
      %v368 = vpack.c.b16 %v330, %v328
      %v369 = vpack.c.b16 %v333, %v331
      %v370 = vpack.c.b16 %v334, %v332
      %v371 = vpack.c.b16 %v337, %v335
      %v372 = vpack.c.b16 %v338, %v336
      %v373 = vpack.c.b16 %v341, %v339
      %v374 = vpack.c.b16 %v342, %v340
      %v439 = vunpack.c.l.b16 %v210
      %v440 = vunpack.c.l.b16 %v211
      %v441 = vunpack.c.l.b16 %v212
      %v442 = vunpack.c.l.b16 %v213
      %v443 = vunpack.c.l.b16 %v214
      %v444 = vunpack.c.l.b16 %v215
      %v445 = vunpack.c.l.b16 %v216
      %v446 = vunpack.c.l.b16 %v217
      %v447 = vunpack.c.l.b16 %v218
      %v448 = vunpack.c.l.b16 %v219
      %v449 = vunpack.c.l.b16 %v220
      %v450 = vunpack.c.l.b16 %v221
      %v451 = vunpack.c.l.b16 %v222
      %v452 = vunpack.c.l.b16 %v223
      %v453 = vunpack.c.l.b16 %v224
      %v454 = vunpack.c.l.b16 %v225
      %v455 = vunpack.c.l.b16 %v226
      %v456 = vunpack.c.l.b16 %v227
      %v457 = vunpack.c.l.b16 %v228
      %v458 = vunpack.c.l.b16 %v229
      %v459 = vunpack.c.l.b16 %v230
      %v460 = vunpack.c.l.b16 %v231
      %v461 = vunpack.c.l.b16 %v232
      %v462 = vunpack.c.l.b16 %v233
      %v463 = vunpack.c.l.b16 %v234
      %v464 = vunpack.c.l.b16 %v235
      %v465 = vunpack.c.l.b16 %v236
      %v466 = vunpack.c.l.b16 %v237
      %v467 = vunpack.c.l.b16 %v238
      %v468 = vunpack.c.l.b16 %v239
      %v469 = vunpack.c.l.b16 %v240
      %v470 = vunpack.c.l.b16 %v241
      %v471 = vpack.c.b16 %v440, %v439
      %v472 = vpack.c.b16 %v442, %v441
      %v473 = vpack.c.b16 %v444, %v443
      %v474 = vpack.c.b16 %v446, %v445
      %v475 = vpack.c.b16 %v448, %v447
      %v476 = vpack.c.b16 %v450, %v449
      %v477 = vpack.c.b16 %v452, %v451
      %v478 = vpack.c.b16 %v454, %v453
      %v479 = vpack.c.b16 %v456, %v455
      %v480 = vpack.c.b16 %v458, %v457
      %v481 = vpack.c.b16 %v460, %v459
      %v482 = vpack.c.b16 %v462, %v461
      %v483 = vpack.c.b16 %v464, %v463
      %v484 = vpack.c.b16 %v466, %v465
      %v485 = vpack.c.b16 %v468, %v467
      %v486 = vpack.c.b16 %v470, %v469
      %503 = vmatprep.subr.bf16.mxu0 0
      %504 = vmatpush1.bf16.msra.mxu0 %v478
      %505 = vmatprep.subr.bf16.mxu0 0
      %506 = vmatpush1.bf16.msra.mxu0 %v477
      %507 = vmatprep.subr.bf16.mxu0 0
      %508 = vmatpush1.bf16.msra.mxu0 %v476
      %509 = vmatprep.subr.bf16.mxu0 0
      %510 = vmatpush1.bf16.msra.mxu0 %v475
      %511 = vmatprep.subr.bf16.mxu0 0
      %512 = vmatpush1.bf16.msra.mxu0 %v474
      %513 = vmatprep.subr.bf16.mxu0 0
      %514 = vmatpush1.bf16.msra.mxu0 %v473
      %515 = vmatprep.subr.bf16.mxu0 0
      %516 = vmatpush1.bf16.msra.mxu0 %v472
      %517 = vmatprep.subr.bf16.mxu0 0
      %518 = vmatpush1.bf16.msra.mxu0 %v471
      %519 = vmatprep.subr.bf16.mxu0 0
      %520 = vmatpush2.bf16.msra.mxu0 %v486
      %521 = vmatprep.subr.bf16.mxu0 0
      %522 = vmatpush2.bf16.msra.mxu0 %v485
      %523 = vmatprep.subr.bf16.mxu0 0
      %524 = vmatpush2.bf16.msra.mxu0 %v484
      %525 = vmatprep.subr.bf16.mxu0 0
      %526 = vmatpush2.bf16.msra.mxu0 %v483
      %527 = vmatprep.subr.bf16.mxu0 0
      %528 = vmatpush2.bf16.msra.mxu0 %v482
      %529 = vmatprep.subr.bf16.mxu0 0
      %530 = vmatpush2.bf16.msra.mxu0 %v481
      %531 = vmatprep.subr.bf16.mxu0 0
      %532 = vmatpush2.bf16.msra.mxu0 %v480
      %533 = vmatprep.subr.bf16.mxu0 0
      %534 = vmatpush2.bf16.msra.mxu0 %v479
      %535 = vmatprep.mubr.bf16.mxu0 %v344
      %536 = vmatmul.mubr.bf16.gmra.mxu0 %v343
      %v537 = vpop.f32.mrf.mxu0
      %v538 = vadd.f32 %v246, %v537
      %v539 = vpop.f32.mrf.mxu0
      %v540 = vpop.f32.mrf.mxu0
      %v541 = vadd.f32 %v246, %v540
      %v542 = vpop.f32.mrf.mxu0
      %543 = vmatprep.mubr.bf16.mxu0 %v346
      %544 = vmatmul.mubr.bf16.gmra.mxu0 %v345
      %v545 = vpop.f32.mrf.mxu0
      %v546 = vadd.f32 %v246, %v545
      %v547 = vpop.f32.mrf.mxu0
      %v548 = vpop.f32.mrf.mxu0
      %v549 = vadd.f32 %v246, %v548
      %v550 = vpop.f32.mrf.mxu0
      %551 = vmatprep.mubr.bf16.mxu0 %v348
      %552 = vmatmul.mubr.bf16.gmra.mxu0 %v347
      %v553 = vpop.f32.mrf.mxu0
      %v554 = vadd.f32 %v246, %v553
      %v555 = vpop.f32.mrf.mxu0
      %v556 = vpop.f32.mrf.mxu0
      %v557 = vadd.f32 %v246, %v556
      %v558 = vpop.f32.mrf.mxu0
      %559 = vmatprep.mubr.bf16.mxu0 %v350
      %560 = vmatmul.mubr.bf16.gmra.mxu0 %v349
      %v561 = vpop.f32.mrf.mxu0
      %v562 = vadd.f32 %v246, %v561
      %v563 = vpop.f32.mrf.mxu0
      %v564 = vpop.f32.mrf.mxu0
      %v565 = vadd.f32 %v246, %v564
      %v566 = vpop.f32.mrf.mxu0
      %567 = vmatprep.mubr.bf16.mxu0 %v352
      %568 = vmatmul.mubr.bf16.gmra.mxu0 %v351
      %v569 = vpop.f32.mrf.mxu0
      %v570 = vadd.f32 %v246, %v569
      %v571 = vpop.f32.mrf.mxu0
      %v572 = vpop.f32.mrf.mxu0
      %v573 = vadd.f32 %v246, %v572
      %v574 = vpop.f32.mrf.mxu0
      %575 = vmatprep.mubr.bf16.mxu0 %v354
      %576 = vmatmul.mubr.bf16.gmra.mxu0 %v353
      %v577 = vpop.f32.mrf.mxu0
      %v578 = vadd.f32 %v246, %v577
      %v579 = vpop.f32.mrf.mxu0
      %v580 = vpop.f32.mrf.mxu0
      %v581 = vadd.f32 %v246, %v580
      %v582 = vpop.f32.mrf.mxu0
      %583 = vmatprep.mubr.bf16.mxu0 %v356
      %584 = vmatmul.mubr.bf16.gmra.mxu0 %v355
      %v585 = vpop.f32.mrf.mxu0
      %v586 = vadd.f32 %v246, %v585
      %v587 = vpop.f32.mrf.mxu0
      %v588 = vpop.f32.mrf.mxu0
      %v589 = vadd.f32 %v246, %v588
      %v590 = vpop.f32.mrf.mxu0
      %591 = vmatprep.mubr.bf16.mxu0 %v358
      %592 = vmatmul.mubr.bf16.gmra.mxu0 %v357
      %v593 = vpop.f32.mrf.mxu0
      %v594 = vadd.f32 %v246, %v593
      %v595 = vpop.f32.mrf.mxu0
      %v596 = vpop.f32.mrf.mxu0
      %v597 = vadd.f32 %v246, %v596
      %v598 = vpop.f32.mrf.mxu0
      %599 = vmatprep.mubr.bf16.mxu0 %v360
      %600 = vmatmul.mubr.bf16.gmra.mxu0 %v359
      %v601 = vpop.f32.mrf.mxu0
      %v602 = vadd.f32 %v246, %v601
      %v603 = vpop.f32.mrf.mxu0
      %v604 = vpop.f32.mrf.mxu0
      %v605 = vadd.f32 %v246, %v604
      %v606 = vpop.f32.mrf.mxu0
      %607 = vmatprep.mubr.bf16.mxu0 %v362
      %608 = vmatmul.mubr.bf16.gmra.mxu0 %v361
      %v609 = vpop.f32.mrf.mxu0
      %v610 = vadd.f32 %v246, %v609
      %v611 = vpop.f32.mrf.mxu0
      %v612 = vpop.f32.mrf.mxu0
      %v613 = vadd.f32 %v246, %v612
      %v614 = vpop.f32.mrf.mxu0
      %615 = vmatprep.mubr.bf16.mxu0 %v364
      %616 = vmatmul.mubr.bf16.gmra.mxu0 %v363
      %v617 = vpop.f32.mrf.mxu0
      %v618 = vadd.f32 %v246, %v617
      %v619 = vpop.f32.mrf.mxu0
      %v620 = vpop.f32.mrf.mxu0
      %v621 = vadd.f32 %v246, %v620
      %v622 = vpop.f32.mrf.mxu0
      %623 = vmatprep.mubr.bf16.mxu0 %v366
      %624 = vmatmul.mubr.bf16.gmra.mxu0 %v365
      %v625 = vpop.f32.mrf.mxu0
      %v626 = vadd.f32 %v246, %v625
      %v627 = vpop.f32.mrf.mxu0
      %v628 = vpop.f32.mrf.mxu0
      %v629 = vadd.f32 %v246, %v628
      %v630 = vpop.f32.mrf.mxu0
      %631 = vmatprep.mubr.bf16.mxu0 %v368
      %632 = vmatmul.mubr.bf16.gmra.mxu0 %v367
      %v633 = vpop.f32.mrf.mxu0
      %v634 = vadd.f32 %v246, %v633
      %v635 = vpop.f32.mrf.mxu0
      %v636 = vpop.f32.mrf.mxu0
      %v637 = vadd.f32 %v246, %v636
      %v638 = vpop.f32.mrf.mxu0
      %639 = vmatprep.mubr.bf16.mxu0 %v370
      %640 = vmatmul.mubr.bf16.gmra.mxu0 %v369
      %v641 = vpop.f32.mrf.mxu0
      %v642 = vadd.f32 %v246, %v641
      %v643 = vpop.f32.mrf.mxu0
      %v644 = vpop.f32.mrf.mxu0
      %v645 = vadd.f32 %v246, %v644
      %v646 = vpop.f32.mrf.mxu0
      %647 = vmatprep.mubr.bf16.mxu0 %v372
      %648 = vmatmul.mubr.bf16.gmra.mxu0 %v371
      %v649 = vpop.f32.mrf.mxu0
      %v650 = vadd.f32 %v246, %v649
      %v651 = vpop.f32.mrf.mxu0
      %v652 = vpop.f32.mrf.mxu0
      %v653 = vadd.f32 %v246, %v652
      %v654 = vpop.f32.mrf.mxu0
      %655 = vmatprep.mubr.bf16.mxu0 %v374
      %656 = vmatmul.mubr.bf16.gmra.mxu0 %v373
      %v657 = vpop.f32.mrf.mxu0
      %v658 = vadd.f32 %v246, %v657
      %v659 = vpop.f32.mrf.mxu0
      %v660 = vpop.f32.mrf.mxu0
      %v661 = vadd.f32 %v246, %v660
      %v662 = vpop.f32.mrf.mxu0
      %663 = vdwg.mxu0
      %v664 = vmax.f32 %v538, 0.0
      %v665 = vmax.f32 %v541, 0.0
      %v666 = vmax.f32 %v546, 0.0
      %v667 = vmax.f32 %v549, 0.0
      %v668 = vmax.f32 %v554, 0.0
      %v669 = vmax.f32 %v557, 0.0
      %v670 = vmax.f32 %v562, 0.0
      %v671 = vmax.f32 %v565, 0.0
      %v672 = vmax.f32 %v570, 0.0
      %v673 = vmax.f32 %v573, 0.0
      %v674 = vmax.f32 %v578, 0.0
      %v675 = vmax.f32 %v581, 0.0
      %v676 = vmax.f32 %v586, 0.0
      %v677 = vmax.f32 %v589, 0.0
      %v678 = vmax.f32 %v594, 0.0
      %v679 = vmax.f32 %v597, 0.0
      %v680 = vmax.f32 %v602, 0.0
      %v681 = vmax.f32 %v605, 0.0
      %v682 = vmax.f32 %v610, 0.0
      %v683 = vmax.f32 %v613, 0.0
      %v684 = vmax.f32 %v618, 0.0
      %v685 = vmax.f32 %v621, 0.0
      %v686 = vmax.f32 %v626, 0.0
      %v687 = vmax.f32 %v629, 0.0
      %v688 = vmax.f32 %v634, 0.0
      %v689 = vmax.f32 %v637, 0.0
      %v690 = vmax.f32 %v642, 0.0
      %v691 = vmax.f32 %v645, 0.0
      %v692 = vmax.f32 %v650, 0.0
      %v693 = vmax.f32 %v653, 0.0
      %v694 = vmax.f32 %v658, 0.0
      %v695 = vmax.f32 %v661, 0.0
      %v696 = vpack.c.bf16 %v665, %v664
      %v697 = vpack.c.bf16 %v667, %v666
      %v698 = vpack.c.bf16 %v669, %v668
      %v699 = vpack.c.bf16 %v671, %v670
      %v700 = vpack.c.bf16 %v673, %v672
      %v701 = vpack.c.bf16 %v675, %v674
      %v702 = vpack.c.bf16 %v677, %v676
      %v703 = vpack.c.bf16 %v679, %v678
      %v704 = vpack.c.bf16 %v681, %v680
      %v705 = vpack.c.bf16 %v683, %v682
      %v706 = vpack.c.bf16 %v685, %v684
      %v707 = vpack.c.bf16 %v687, %v686
      %v708 = vpack.c.bf16 %v689, %v688
      %v709 = vpack.c.bf16 %v691, %v690
      %v710 = vpack.c.bf16 %v693, %v692
      %v711 = vpack.c.bf16 %v695, %v694
      %v712 = vld [vmem:[%s1 + $0x80] sm:$0xf]
      %v713 = vld [vmem:[%s1 + $0x84] sm:$0xf]
      %v714 = vld [vmem:[%s1 + $0x88] sm:$0xf]
      %v715 = vld [vmem:[%s1 + $0x8c] sm:$0xf]
      %v716 = vld [vmem:[%s1 + $0x90] sm:$0xf]
      %v717 = vld [vmem:[%s1 + $0x94] sm:$0xf]
      %v718 = vld [vmem:[%s1 + $0x98] sm:$0xf]
      %v719 = vld [vmem:[%s1 + $0x9c] sm:$0xf]
      %v720 = vld [vmem:[%s1 + $0xa0] sm:$0xf]
      %v721 = vld [vmem:[%s1 + $0xa4] sm:$0xf]
      %v722 = vld [vmem:[%s1 + $0xa8] sm:$0xf]
      %v723 = vld [vmem:[%s1 + $0xac] sm:$0xf]
      %v724 = vld [vmem:[%s1 + $0xb0] sm:$0xf]
      %v725 = vld [vmem:[%s1 + $0xb4] sm:$0xf]
      %v726 = vld [vmem:[%s1 + $0xb8] sm:$0xf]
      %v727 = vld [vmem:[%s1 + $0xbc] sm:$0xf]
      %v728 = vld [vmem:[%s2 + $0x1] sm:$0x1]
      %v729 = vlaneseq
      %v730 = vshrl.u32 %v729, 7
      %v731 = vsub.s32 0, %v730
      %v732 = vrot.slane %v728, %v731
      %v749 = vunpack.c.l.b16 %v712
      %v750 = vunpack.c.l.b16 %v713
      %v751 = vunpack.c.l.b16 %v714
      %v752 = vunpack.c.l.b16 %v715
      %v753 = vunpack.c.l.b16 %v716
      %v754 = vunpack.c.l.b16 %v717
      %v755 = vunpack.c.l.b16 %v718
      %v756 = vunpack.c.l.b16 %v719
      %v757 = vunpack.c.l.b16 %v720
      %v758 = vunpack.c.l.b16 %v721
      %v759 = vunpack.c.l.b16 %v722
      %v760 = vunpack.c.l.b16 %v723
      %v761 = vunpack.c.l.b16 %v724
      %v762 = vunpack.c.l.b16 %v725
      %v763 = vunpack.c.l.b16 %v726
      %v764 = vunpack.c.l.b16 %v727
      %v765 = vpack.c.b16 %v750, %v749
      %v766 = vpack.c.b16 %v752, %v751
      %v767 = vpack.c.b16 %v754, %v753
      %v768 = vpack.c.b16 %v756, %v755
      %v769 = vpack.c.b16 %v758, %v757
      %v770 = vpack.c.b16 %v760, %v759
      %v771 = vpack.c.b16 %v762, %v761
      %v772 = vpack.c.b16 %v764, %v763
      %781 = vmatprep.subr.bf16.mxu0 0
      %782 = vmatpush1.bf16.msra.mxu0 %v772
      %783 = vmatprep.subr.bf16.mxu0 0
      %784 = vmatpush1.bf16.msra.mxu0 %v771
      %785 = vmatprep.subr.bf16.mxu0 0
      %786 = vmatpush1.bf16.msra.mxu0 %v770
      %787 = vmatprep.subr.bf16.mxu0 0
      %788 = vmatpush1.bf16.msra.mxu0 %v769
      %789 = vmatprep.subr.bf16.mxu0 0
      %790 = vmatpush1.bf16.msra.mxu0 %v768
      %791 = vmatprep.subr.bf16.mxu0 0
      %792 = vmatpush1.bf16.msra.mxu0 %v767
      %793 = vmatprep.subr.bf16.mxu0 0
      %794 = vmatpush1.bf16.msra.mxu0 %v766
      %795 = vmatprep.subr.bf16.mxu0 0
      %796 = vmatpush1.bf16.msra.mxu0 %v765
      %797 = vmatprep.subr.bf16.mxu0 0
      %798 = vmatpush2.bf16.msra.mxu0 0
      %799 = vmatprep.subr.bf16.mxu0 0
      %800 = vmatpush2.bf16.msra.mxu0 0
      %801 = vmatprep.subr.bf16.mxu0 0
      %802 = vmatpush2.bf16.msra.mxu0 0
      %803 = vmatprep.subr.bf16.mxu0 0
      %804 = vmatpush2.bf16.msra.mxu0 0
      %805 = vmatprep.subr.bf16.mxu0 0
      %806 = vmatpush2.bf16.msra.mxu0 0
      %807 = vmatprep.subr.bf16.mxu0 0
      %808 = vmatpush2.bf16.msra.mxu0 0
      %809 = vmatprep.subr.bf16.mxu0 0
      %810 = vmatpush2.bf16.msra.mxu0 0
      %811 = vmatprep.subr.bf16.mxu0 0
      %812 = vmatpush2.bf16.msra.mxu0 0
      %813 = vmatprep.mubr.bf16.mxu0 0
      %814 = vmatmul.mubr.bf16.gmra.mxu0 %v696
      %v815 = vpop.f32.mrf.mxu0
      %v816 = vadd.f32 %v732, %v815
      %v817 = vpop.f32.mrf.mxu0
      %v818 = vpop.f32.mrf.mxu0
      %v819 = vadd.f32 %v732, %v818
      %v820 = vpop.f32.mrf.mxu0
      %821 = vmatprep.mubr.bf16.mxu0 0
      %822 = vmatmul.mubr.bf16.gmra.mxu0 %v697
      %v823 = vpop.f32.mrf.mxu0
      %v824 = vadd.f32 %v732, %v823
      %v825 = vpop.f32.mrf.mxu0
      %v826 = vpop.f32.mrf.mxu0
      %v827 = vadd.f32 %v732, %v826
      %v828 = vpop.f32.mrf.mxu0
      %829 = vmatprep.mubr.bf16.mxu0 0
      %830 = vmatmul.mubr.bf16.gmra.mxu0 %v698
      %v831 = vpop.f32.mrf.mxu0
      %v832 = vadd.f32 %v732, %v831
      %v833 = vpop.f32.mrf.mxu0
      %v834 = vpop.f32.mrf.mxu0
      %v835 = vadd.f32 %v732, %v834
      %v836 = vpop.f32.mrf.mxu0
      %837 = vmatprep.mubr.bf16.mxu0 0
      %838 = vmatmul.mubr.bf16.gmra.mxu0 %v699
      %v839 = vpop.f32.mrf.mxu0
      %v840 = vadd.f32 %v732, %v839
      %v841 = vpop.f32.mrf.mxu0
      %v842 = vpop.f32.mrf.mxu0
      %v843 = vadd.f32 %v732, %v842
      %v844 = vpop.f32.mrf.mxu0
      %845 = vmatprep.mubr.bf16.mxu0 0
      %846 = vmatmul.mubr.bf16.gmra.mxu0 %v700
      %v847 = vpop.f32.mrf.mxu0
      %v848 = vadd.f32 %v732, %v847
      %v849 = vpop.f32.mrf.mxu0
      %v850 = vpop.f32.mrf.mxu0
      %v851 = vadd.f32 %v732, %v850
      %v852 = vpop.f32.mrf.mxu0
      %853 = vmatprep.mubr.bf16.mxu0 0
      %854 = vmatmul.mubr.bf16.gmra.mxu0 %v701
      %v855 = vpop.f32.mrf.mxu0
      %v856 = vadd.f32 %v732, %v855
      %v857 = vpop.f32.mrf.mxu0
      %v858 = vpop.f32.mrf.mxu0
      %v859 = vadd.f32 %v732, %v858
      %v860 = vpop.f32.mrf.mxu0
      %861 = vmatprep.mubr.bf16.mxu0 0
      %862 = vmatmul.mubr.bf16.gmra.mxu0 %v702
      %v863 = vpop.f32.mrf.mxu0
      %v864 = vadd.f32 %v732, %v863
      %v865 = vpop.f32.mrf.mxu0
      %v866 = vpop.f32.mrf.mxu0
      %v867 = vadd.f32 %v732, %v866
      %v868 = vpop.f32.mrf.mxu0
      %869 = vmatprep.mubr.bf16.mxu0 0
      %870 = vmatmul.mubr.bf16.gmra.mxu0 %v703
      %v871 = vpop.f32.mrf.mxu0
      %v872 = vadd.f32 %v732, %v871
      %v873 = vpop.f32.mrf.mxu0
      %v874 = vpop.f32.mrf.mxu0
      %v875 = vadd.f32 %v732, %v874
      %v876 = vpop.f32.mrf.mxu0
      %877 = vmatprep.mubr.bf16.mxu0 0
      %878 = vmatmul.mubr.bf16.gmra.mxu0 %v704
      %v879 = vpop.f32.mrf.mxu0
      %v880 = vadd.f32 %v732, %v879
      %v881 = vpop.f32.mrf.mxu0
      %v882 = vpop.f32.mrf.mxu0
      %v883 = vadd.f32 %v732, %v882
      %v884 = vpop.f32.mrf.mxu0
      %885 = vmatprep.mubr.bf16.mxu0 0
      %886 = vmatmul.mubr.bf16.gmra.mxu0 %v705
      %v887 = vpop.f32.mrf.mxu0
      %v888 = vadd.f32 %v732, %v887
      %v889 = vpop.f32.mrf.mxu0
      %v890 = vpop.f32.mrf.mxu0
      %v891 = vadd.f32 %v732, %v890
      %v892 = vpop.f32.mrf.mxu0
      %893 = vmatprep.mubr.bf16.mxu0 0
      %894 = vmatmul.mubr.bf16.gmra.mxu0 %v706
      %v895 = vpop.f32.mrf.mxu0
      %v896 = vadd.f32 %v732, %v895
      %v897 = vpop.f32.mrf.mxu0
      %v898 = vpop.f32.mrf.mxu0
      %v899 = vadd.f32 %v732, %v898
      %v900 = vpop.f32.mrf.mxu0
      %901 = vmatprep.mubr.bf16.mxu0 0
      %902 = vmatmul.mubr.bf16.gmra.mxu0 %v707
      %v903 = vpop.f32.mrf.mxu0
      %v904 = vadd.f32 %v732, %v903
      %v905 = vpop.f32.mrf.mxu0
      %v906 = vpop.f32.mrf.mxu0
      %v907 = vadd.f32 %v732, %v906
      %v908 = vpop.f32.mrf.mxu0
      %909 = vmatprep.mubr.bf16.mxu0 0
      %910 = vmatmul.mubr.bf16.gmra.mxu0 %v708
      %v911 = vpop.f32.mrf.mxu0
      %v912 = vadd.f32 %v732, %v911
      %v913 = vpop.f32.mrf.mxu0
      %v914 = vpop.f32.mrf.mxu0
      %v915 = vadd.f32 %v732, %v914
      %v916 = vpop.f32.mrf.mxu0
      %917 = vmatprep.mubr.bf16.mxu0 0
      %918 = vmatmul.mubr.bf16.gmra.mxu0 %v709
      %v919 = vpop.f32.mrf.mxu0
      %v920 = vadd.f32 %v732, %v919
      %v921 = vpop.f32.mrf.mxu0
      %v922 = vpop.f32.mrf.mxu0
      %v923 = vadd.f32 %v732, %v922
      %v924 = vpop.f32.mrf.mxu0
      %925 = vmatprep.mubr.bf16.mxu0 0
      %926 = vmatmul.mubr.bf16.gmra.mxu0 %v710
      %v927 = vpop.f32.mrf.mxu0
      %v928 = vadd.f32 %v732, %v927
      %v929 = vpop.f32.mrf.mxu0
      %v930 = vpop.f32.mrf.mxu0
      %v931 = vadd.f32 %v732, %v930
      %v932 = vpop.f32.mrf.mxu0
      %933 = vmatprep.mubr.bf16.mxu0 0
      %934 = vmatmul.mubr.bf16.gmra.mxu0 %v711
      %v935 = vpop.f32.mrf.mxu0
      %v936 = vadd.f32 %v732, %v935
      %v937 = vpop.f32.mrf.mxu0
      %v938 = vpop.f32.mrf.mxu0
      %v939 = vadd.f32 %v732, %v938
      %v940 = vpop.f32.mrf.mxu0
      %941 = vdwg.mxu0
      %v942 = vmax.f32 %v816, 0.0
      %v943 = vmax.f32 %v819, 0.0
      %v944 = vmax.f32 %v824, 0.0
      %v945 = vmax.f32 %v827, 0.0
      %v946 = vmax.f32 %v832, 0.0
      %v947 = vmax.f32 %v835, 0.0
      %v948 = vmax.f32 %v840, 0.0
      %v949 = vmax.f32 %v843, 0.0
      %v950 = vmax.f32 %v848, 0.0
      %v951 = vmax.f32 %v851, 0.0
      %v952 = vmax.f32 %v856, 0.0
      %v953 = vmax.f32 %v859, 0.0
      %v954 = vmax.f32 %v864, 0.0
      %v955 = vmax.f32 %v867, 0.0
      %v956 = vmax.f32 %v872, 0.0
      %v957 = vmax.f32 %v875, 0.0
      %v958 = vmax.f32 %v880, 0.0
      %v959 = vmax.f32 %v883, 0.0
      %v960 = vmax.f32 %v888, 0.0
      %v961 = vmax.f32 %v891, 0.0
      %v962 = vmax.f32 %v896, 0.0
      %v963 = vmax.f32 %v899, 0.0
      %v964 = vmax.f32 %v904, 0.0
      %v965 = vmax.f32 %v907, 0.0
      %v966 = vmax.f32 %v912, 0.0
      %v967 = vmax.f32 %v915, 0.0
      %v968 = vmax.f32 %v920, 0.0
      %v969 = vmax.f32 %v923, 0.0
      %v970 = vmax.f32 %v928, 0.0
      %v971 = vmax.f32 %v931, 0.0
      %v972 = vmax.f32 %v936, 0.0
      %v973 = vmax.f32 %v939, 0.0
      %v974 = vpack.c.bf16 %v943, %v942
      %v975 = vpack.c.bf16 %v945, %v944
      %v976 = vpack.c.bf16 %v947, %v946
      %v977 = vpack.c.bf16 %v949, %v948
      %v978 = vpack.c.bf16 %v951, %v950
      %v979 = vpack.c.bf16 %v953, %v952
      %v980 = vpack.c.bf16 %v955, %v954
      %v981 = vpack.c.bf16 %v957, %v956
      %v982 = vpack.c.bf16 %v959, %v958
      %v983 = vpack.c.bf16 %v961, %v960
      %v984 = vpack.c.bf16 %v963, %v962
      %v985 = vpack.c.bf16 %v965, %v964
      %v986 = vpack.c.bf16 %v967, %v966
      %v987 = vpack.c.bf16 %v969, %v968
      %v988 = vpack.c.bf16 %v971, %v970
      %v989 = vpack.c.bf16 %v973, %v972
      %v990 = vld [vmem:[%s1 + $0xc0] sm:$0xf]
      %v991 = vld [vmem:[%s1 + $0xc4] sm:$0xf]
      %v992 = vld [vmem:[%s1 + $0xc8] sm:$0xf]
      %v993 = vld [vmem:[%s1 + $0xcc] sm:$0xf]
      %v994 = vld [vmem:[%s1 + $0xd0] sm:$0xf]
      %v995 = vld [vmem:[%s1 + $0xd4] sm:$0xf]
      %v996 = vld [vmem:[%s1 + $0xd8] sm:$0xf]
      %v997 = vld [vmem:[%s1 + $0xdc] sm:$0xf]
      %v998 = vld [vmem:[%s1 + $0xe0] sm:$0xf]
      %v999 = vld [vmem:[%s1 + $0xe4] sm:$0xf]
      %v1000 = vld [vmem:[%s1 + $0xe8] sm:$0xf]
      %v1001 = vld [vmem:[%s1 + $0xec] sm:$0xf]
      %v1002 = vld [vmem:[%s1 + $0xf0] sm:$0xf]
      %v1003 = vld [vmem:[%s1 + $0xf4] sm:$0xf]
      %v1004 = vld [vmem:[%s1 + $0xf8] sm:$0xf]
      %v1005 = vld [vmem:[%s1 + $0xfc] sm:$0xf]
      %v1006 = vld [vmem:[%s2 + $0x2] sm:$0x1]
      %v1007 = vlaneseq
      %v1008 = vshrl.u32 %v1007, 7
      %v1009 = vsub.s32 0, %v1008
      %v1010 = vrot.slane %v1006, %v1009
      %v1027 = vunpack.c.l.b16 %v990
      %v1028 = vunpack.c.l.b16 %v991
      %v1029 = vunpack.c.l.b16 %v992
      %v1030 = vunpack.c.l.b16 %v993
      %v1031 = vunpack.c.l.b16 %v994
      %v1032 = vunpack.c.l.b16 %v995
      %v1033 = vunpack.c.l.b16 %v996
      %v1034 = vunpack.c.l.b16 %v997
      %v1035 = vunpack.c.l.b16 %v998
      %v1036 = vunpack.c.l.b16 %v999
      %v1037 = vunpack.c.l.b16 %v1000
      %v1038 = vunpack.c.l.b16 %v1001
      %v1039 = vunpack.c.l.b16 %v1002
      %v1040 = vunpack.c.l.b16 %v1003
      %v1041 = vunpack.c.l.b16 %v1004
      %v1042 = vunpack.c.l.b16 %v1005
      %v1043 = vpack.c.b16 %v1028, %v1027
      %v1044 = vpack.c.b16 %v1030, %v1029
      %v1045 = vpack.c.b16 %v1032, %v1031
      %v1046 = vpack.c.b16 %v1034, %v1033
      %v1047 = vpack.c.b16 %v1036, %v1035
      %v1048 = vpack.c.b16 %v1038, %v1037
      %v1049 = vpack.c.b16 %v1040, %v1039
      %v1050 = vpack.c.b16 %v1042, %v1041
      %1059 = vmatprep.subr.bf16.mxu0 0
      %1060 = vmatpush1.bf16.msra.mxu0 %v1050
      %1061 = vmatprep.subr.bf16.mxu0 0
      %1062 = vmatpush1.bf16.msra.mxu0 %v1049
      %1063 = vmatprep.subr.bf16.mxu0 0
      %1064 = vmatpush1.bf16.msra.mxu0 %v1048
      %1065 = vmatprep.subr.bf16.mxu0 0
      %1066 = vmatpush1.bf16.msra.mxu0 %v1047
      %1067 = vmatprep.subr.bf16.mxu0 0
      %1068 = vmatpush1.bf16.msra.mxu0 %v1046
      %1069 = vmatprep.subr.bf16.mxu0 0
      %1070 = vmatpush1.bf16.msra.mxu0 %v1045
      %1071 = vmatprep.subr.bf16.mxu0 0
      %1072 = vmatpush1.bf16.msra.mxu0 %v1044
      %1073 = vmatprep.subr.bf16.mxu0 0
      %1074 = vmatpush1.bf16.msra.mxu0 %v1043
      %1075 = vmatprep.subr.bf16.mxu0 0
      %1076 = vmatpush2.bf16.msra.mxu0 0
      %1077 = vmatprep.subr.bf16.mxu0 0
      %1078 = vmatpush2.bf16.msra.mxu0 0
      %1079 = vmatprep.subr.bf16.mxu0 0
      %1080 = vmatpush2.bf16.msra.mxu0 0
      %1081 = vmatprep.subr.bf16.mxu0 0
      %1082 = vmatpush2.bf16.msra.mxu0 0
      %1083 = vmatprep.subr.bf16.mxu0 0
      %1084 = vmatpush2.bf16.msra.mxu0 0
      %1085 = vmatprep.subr.bf16.mxu0 0
      %1086 = vmatpush2.bf16.msra.mxu0 0
      %1087 = vmatprep.subr.bf16.mxu0 0
      %1088 = vmatpush2.bf16.msra.mxu0 0
      %1089 = vmatprep.subr.bf16.mxu0 0
      %1090 = vmatpush2.bf16.msra.mxu0 0
      %1091 = vmatprep.mubr.bf16.mxu0 0
      %1092 = vmatmul.mubr.bf16.gmra.mxu0 %v974
      %v1093 = vpop.f32.mrf.mxu0
      %v1094 = vadd.f32 %v1010, %v1093
      %v1095 = vpop.f32.mrf.mxu0
      %v1096 = vpop.f32.mrf.mxu0
      %v1097 = vadd.f32 %v1010, %v1096
      %v1098 = vpop.f32.mrf.mxu0
      %1099 = vmatprep.mubr.bf16.mxu0 0
      %1100 = vmatmul.mubr.bf16.gmra.mxu0 %v975
      %v1101 = vpop.f32.mrf.mxu0
      %v1102 = vadd.f32 %v1010, %v1101
      %v1103 = vpop.f32.mrf.mxu0
      %v1104 = vpop.f32.mrf.mxu0
      %v1105 = vadd.f32 %v1010, %v1104
      %v1106 = vpop.f32.mrf.mxu0
      %1107 = vmatprep.mubr.bf16.mxu0 0
      %1108 = vmatmul.mubr.bf16.gmra.mxu0 %v976
      %v1109 = vpop.f32.mrf.mxu0
      %v1110 = vadd.f32 %v1010, %v1109
      %v1111 = vpop.f32.mrf.mxu0
      %v1112 = vpop.f32.mrf.mxu0
      %v1113 = vadd.f32 %v1010, %v1112
      %v1114 = vpop.f32.mrf.mxu0
      %1115 = vmatprep.mubr.bf16.mxu0 0
      %1116 = vmatmul.mubr.bf16.gmra.mxu0 %v977
      %v1117 = vpop.f32.mrf.mxu0
      %v1118 = vadd.f32 %v1010, %v1117
      %v1119 = vpop.f32.mrf.mxu0
      %v1120 = vpop.f32.mrf.mxu0
      %v1121 = vadd.f32 %v1010, %v1120
      %v1122 = vpop.f32.mrf.mxu0
      %1123 = vmatprep.mubr.bf16.mxu0 0
      %1124 = vmatmul.mubr.bf16.gmra.mxu0 %v978
      %v1125 = vpop.f32.mrf.mxu0
      %v1126 = vadd.f32 %v1010, %v1125
      %v1127 = vpop.f32.mrf.mxu0
      %v1128 = vpop.f32.mrf.mxu0
      %v1129 = vadd.f32 %v1010, %v1128
      %v1130 = vpop.f32.mrf.mxu0
      %1131 = vmatprep.mubr.bf16.mxu0 0
      %1132 = vmatmul.mubr.bf16.gmra.mxu0 %v979
      %v1133 = vpop.f32.mrf.mxu0
      %v1134 = vadd.f32 %v1010, %v1133
      %v1135 = vpop.f32.mrf.mxu0
      %v1136 = vpop.f32.mrf.mxu0
      %v1137 = vadd.f32 %v1010, %v1136
      %v1138 = vpop.f32.mrf.mxu0
      %1139 = vmatprep.mubr.bf16.mxu0 0
      %1140 = vmatmul.mubr.bf16.gmra.mxu0 %v980
      %v1141 = vpop.f32.mrf.mxu0
      %v1142 = vadd.f32 %v1010, %v1141
      %v1143 = vpop.f32.mrf.mxu0
      %v1144 = vpop.f32.mrf.mxu0
      %v1145 = vadd.f32 %v1010, %v1144
      %v1146 = vpop.f32.mrf.mxu0
      %1147 = vmatprep.mubr.bf16.mxu0 0
      %1148 = vmatmul.mubr.bf16.gmra.mxu0 %v981
      %v1149 = vpop.f32.mrf.mxu0
      %v1150 = vadd.f32 %v1010, %v1149
      %v1151 = vpop.f32.mrf.mxu0
      %v1152 = vpop.f32.mrf.mxu0
      %v1153 = vadd.f32 %v1010, %v1152
      %v1154 = vpop.f32.mrf.mxu0
      %1155 = vmatprep.mubr.bf16.mxu0 0
      %1156 = vmatmul.mubr.bf16.gmra.mxu0 %v982
      %v1157 = vpop.f32.mrf.mxu0
      %v1158 = vadd.f32 %v1010, %v1157
      %v1159 = vpop.f32.mrf.mxu0
      %v1160 = vpop.f32.mrf.mxu0
      %v1161 = vadd.f32 %v1010, %v1160
      %v1162 = vpop.f32.mrf.mxu0
      %1163 = vmatprep.mubr.bf16.mxu0 0
      %1164 = vmatmul.mubr.bf16.gmra.mxu0 %v983
      %v1165 = vpop.f32.mrf.mxu0
      %v1166 = vadd.f32 %v1010, %v1165
      %v1167 = vpop.f32.mrf.mxu0
      %v1168 = vpop.f32.mrf.mxu0
      %v1169 = vadd.f32 %v1010, %v1168
      %v1170 = vpop.f32.mrf.mxu0
      %1171 = vmatprep.mubr.bf16.mxu0 0
      %1172 = vmatmul.mubr.bf16.gmra.mxu0 %v984
      %v1173 = vpop.f32.mrf.mxu0
      %v1174 = vadd.f32 %v1010, %v1173
      %v1175 = vpop.f32.mrf.mxu0
      %v1176 = vpop.f32.mrf.mxu0
      %v1177 = vadd.f32 %v1010, %v1176
      %v1178 = vpop.f32.mrf.mxu0
      %1179 = vmatprep.mubr.bf16.mxu0 0
      %1180 = vmatmul.mubr.bf16.gmra.mxu0 %v985
      %v1181 = vpop.f32.mrf.mxu0
      %v1182 = vadd.f32 %v1010, %v1181
      %v1183 = vpop.f32.mrf.mxu0
      %v1184 = vpop.f32.mrf.mxu0
      %v1185 = vadd.f32 %v1010, %v1184
      %v1186 = vpop.f32.mrf.mxu0
      %1187 = vmatprep.mubr.bf16.mxu0 0
      %1188 = vmatmul.mubr.bf16.gmra.mxu0 %v986
      %v1189 = vpop.f32.mrf.mxu0
      %v1190 = vadd.f32 %v1010, %v1189
      %v1191 = vpop.f32.mrf.mxu0
      %v1192 = vpop.f32.mrf.mxu0
      %v1193 = vadd.f32 %v1010, %v1192
      %v1194 = vpop.f32.mrf.mxu0
      %1195 = vmatprep.mubr.bf16.mxu0 0
      %1196 = vmatmul.mubr.bf16.gmra.mxu0 %v987
      %v1197 = vpop.f32.mrf.mxu0
      %v1198 = vadd.f32 %v1010, %v1197
      %v1199 = vpop.f32.mrf.mxu0
      %v1200 = vpop.f32.mrf.mxu0
      %v1201 = vadd.f32 %v1010, %v1200
      %v1202 = vpop.f32.mrf.mxu0
      %1203 = vmatprep.mubr.bf16.mxu0 0
      %1204 = vmatmul.mubr.bf16.gmra.mxu0 %v988
      %v1205 = vpop.f32.mrf.mxu0
      %v1206 = vadd.f32 %v1010, %v1205
      %v1207 = vpop.f32.mrf.mxu0
      %v1208 = vpop.f32.mrf.mxu0
      %v1209 = vadd.f32 %v1010, %v1208
      %v1210 = vpop.f32.mrf.mxu0
      %1211 = vmatprep.mubr.bf16.mxu0 0
      %1212 = vmatmul.mubr.bf16.gmra.mxu0 %v989
      %v1213 = vpop.f32.mrf.mxu0
      %v1214 = vadd.f32 %v1010, %v1213
      %v1215 = vpop.f32.mrf.mxu0
      %v1216 = vpop.f32.mrf.mxu0
      %v1217 = vadd.f32 %v1010, %v1216
      %v1218 = vpop.f32.mrf.mxu0
      %1219 = vdwg.mxu0
      %v1220 = vmax.f32 %v1094, 0.0
      %v1221 = vmax.f32 %v1097, 0.0
      %v1222 = vmax.f32 %v1102, 0.0
      %v1223 = vmax.f32 %v1105, 0.0
      %v1224 = vmax.f32 %v1110, 0.0
      %v1225 = vmax.f32 %v1113, 0.0
      %v1226 = vmax.f32 %v1118, 0.0
      %v1227 = vmax.f32 %v1121, 0.0
      %v1228 = vmax.f32 %v1126, 0.0
      %v1229 = vmax.f32 %v1129, 0.0
      %v1230 = vmax.f32 %v1134, 0.0
      %v1231 = vmax.f32 %v1137, 0.0
      %v1232 = vmax.f32 %v1142, 0.0
      %v1233 = vmax.f32 %v1145, 0.0
      %v1234 = vmax.f32 %v1150, 0.0
      %v1235 = vmax.f32 %v1153, 0.0
      %v1236 = vmax.f32 %v1158, 0.0
      %v1237 = vmax.f32 %v1161, 0.0
      %v1238 = vmax.f32 %v1166, 0.0
      %v1239 = vmax.f32 %v1169, 0.0
      %v1240 = vmax.f32 %v1174, 0.0
      %v1241 = vmax.f32 %v1177, 0.0
      %v1242 = vmax.f32 %v1182, 0.0
      %v1243 = vmax.f32 %v1185, 0.0
      %v1244 = vmax.f32 %v1190, 0.0
      %v1245 = vmax.f32 %v1193, 0.0
      %v1246 = vmax.f32 %v1198, 0.0
      %v1247 = vmax.f32 %v1201, 0.0
      %v1248 = vmax.f32 %v1206, 0.0
      %v1249 = vmax.f32 %v1209, 0.0
      %v1250 = vmax.f32 %v1214, 0.0
      %v1251 = vmax.f32 %v1217, 0.0
      %1252 = vst [vmem:[%s175] sm:$0xff] %v1220
      %1253 = vst [vmem:[%s175 + $0x8] sm:$0xff] %v1221
      %1254 = vst [vmem:[%s175 + $0x10] sm:$0xff] %v1222
      %1255 = vst [vmem:[%s175 + $0x18] sm:$0xff] %v1223
      %1256 = vst [vmem:[%s175 + $0x20] sm:$0xff] %v1224
      %1257 = vst [vmem:[%s175 + $0x28] sm:$0xff] %v1225
      %1258 = vst [vmem:[%s175 + $0x30] sm:$0xff] %v1226
      %1259 = vst [vmem:[%s175 + $0x38] sm:$0xff] %v1227
      %1260 = vst [vmem:[%s175 + $0x40] sm:$0xff] %v1228
      %1261 = vst [vmem:[%s175 + $0x48] sm:$0xff] %v1229
      %1262 = vst [vmem:[%s175 + $0x50] sm:$0xff] %v1230
      %1263 = vst [vmem:[%s175 + $0x58] sm:$0xff] %v1231
      %1264 = vst [vmem:[%s175 + $0x60] sm:$0xff] %v1232
      %1265 = vst [vmem:[%s175 + $0x68] sm:$0xff] %v1233
      %1266 = vst [vmem:[%s175 + $0x70] sm:$0xff] %v1234
      %1267 = vst [vmem:[%s175 + $0x78] sm:$0xff] %v1235
      %1268 = vst [vmem:[%s175 + $0x80] sm:$0xff] %v1236
      %1269 = vst [vmem:[%s175 + $0x88] sm:$0xff] %v1237
      %1270 = vst [vmem:[%s175 + $0x90] sm:$0xff] %v1238
      %1271 = vst [vmem:[%s175 + $0x98] sm:$0xff] %v1239
      %1272 = vst [vmem:[%s175 + $0xa0] sm:$0xff] %v1240
      %1273 = vst [vmem:[%s175 + $0xa8] sm:$0xff] %v1241
      %1274 = vst [vmem:[%s175 + $0xb0] sm:$0xff] %v1242
      %1275 = vst [vmem:[%s175 + $0xb8] sm:$0xff] %v1243
      %1276 = vst [vmem:[%s175 + $0xc0] sm:$0xff] %v1244
      %1277 = vst [vmem:[%s175 + $0xc8] sm:$0xff] %v1245
      %1278 = vst [vmem:[%s175 + $0xd0] sm:$0xff] %v1246
      %1279 = vst [vmem:[%s175 + $0xd8] sm:$0xff] %v1247
      %1280 = vst [vmem:[%s175 + $0xe0] sm:$0xff] %v1248
      %1281 = vst [vmem:[%s175 + $0xe8] sm:$0xff] %v1249
      %1282 = vst [vmem:[%s175 + $0xf0] sm:$0xff] %v1250
      %1283 = vst [vmem:[%s175 + $0xf8] sm:$0xff] %v1251
      %s1284 = smul.u32 32, %s14
      %p1285 = scmp.lt.s32.totalorder %s1284, 63
      %s1286 = scalar_select %p1285, %s1284, 63
      %s1287 = smul.addr %s1286, 8
      %s1288 = scalar_lea.vmem %s3, %s1287
      // Predicated region
      $region33: #{firstnet_forward.2} parent=31 // pred_check
        %p1289 = pneg %p100
      $region34: #{firstnet_forward.2} parent=31 // pred_check_branch
        %1291 = sbr.rel (%p1289) target = $region36
      $region35: #{firstnet_forward.2} parent=31 // pred_region
        %s1292 = smul.u32 32, %s14
      $region36: #{firstnet_forward.2} parent=31 // pred_fallthru
        _
    $region32: #{firstnet_forward.2} parent=5 // pred_fallthru
      _
    %p1293 = scmp.le.s32.totalorder 2, %s9
    // Predicated region
    $region37: #{firstnet_forward.2} parent=5 // pred_check
      %p1294 = pneg %p1293
    $region38: #{firstnet_forward.2} parent=5 // pred_check_branch
      %1296 = sbr.rel (%p1294) target = $region40
    $region39: #{firstnet_forward.2} parent=5 // pred_region
      %s1297 = ssub.s32 %s9, 2
      // Predicated region
      $region41: #{firstnet_forward.2} parent=39 // pred_check
        %p1298 = pneg %p106
      $region42: #{firstnet_forward.2} parent=39 // pred_check_branch
        %1300 = sbr.rel (%p1298) target = $region44
      $region43: #{firstnet_forward.2} parent=39 // pred_region
        %s1301 = smul.u32 32, %s15
        %p1302 = scmp.lt.s32.totalorder %s1301, 63
        %s1303 = scalar_select %p1302, %s1301, 63
        %s1304 = smul.addr %s1303, 8
        %s1305 = scalar_lea.vmem %s3, %s1304
      $region44: #{firstnet_forward.2} parent=39 // pred_fallthru
        _
    $region40: #{firstnet_forward.2} parent=5 // pred_fallthru
      _
  $region6: #{firstnet_forward.2} parent=0 // loop_footer
    %s13 = sadd.s32 1, %s9
  $region7: #{firstnet_forward.2} parent=0 // loop_footer_branch
    %8 = sbr.rel target = $region3
  $region8: #{firstnet_forward.2} parent=0 // loop_exit
    _

</llo_original>
